<compile_context>
chip_gen: v7x
topology: tpu7x:2x2x1
jax: 0.10.0
libtpu: 0.0.40
codegen_flags: <defaults>
</compile_context>

<pallas_src>
import functools
import math

import jax
import jax.numpy as jnp
from jax import lax
from jax.experimental import pallas as pl
from jax.experimental.pallas import tpu as pltpu

SELU_ALPHA = 1.6732632423543772
SELU_SCALE = 1.0507009873554805

_TAPS_ROWS = 24  # rows 0..8 dil-1 taps, 9..17 dil-2 taps, 18 channel mean, 19..23 zero


def _round_up(v, m):
    return ((v + m - 1) // m) * m


def aspp_spatial_gate2_kernel(bn_ref, wa_ref, wsp_ref, rc_ref, x_ref, o_ref,
                              taps_ref, *, H, W):
    """One batch element.

    bn_ref  : SMEM (2,)           folded BatchNorm scale, shift
    wa_ref  : VMEM (24, C)        rows 0..8 dil-1 taps, 9..17 dil-2 taps, 18 = 1/C (mean)
    wsp_ref : VMEM (2, 9)         3x3 spatial-conv (2->1) weights, [in_channel, tap]
    rc_ref  : VMEM (2, HWp) int32 row / col index planes (precomputed in the wrapper)
    x_ref   : VMEM (C, HWp)       current batch element, flattened lane-dense
    o_ref   : VMEM (C, HWp)
    taps_ref: VMEM (24, HWp) f32  scratch for the MXU tap planes
    """
    # ---- 18 conv taps + channel mean in ONE MXU matmul (f32 accumulate) ---------
    taps_ref[...] = jnp.dot(wa_ref[...], x_ref[...],
                            preferred_element_type=jnp.float32)       # (24, HWp)

    # ---- channel max (sublane reduction, native dtype) --------------------------
    cmax = jnp.max(x_ref[...], axis=0, keepdims=True).astype(jnp.float32)
    cmean = taps_ref[18:19, :]                                        # folded mean row

    # ---- boundary masks: precomputed row/col planes, memoized single-sided cmps -
    row = rc_ref[0:1, :]
    col = rc_ref[1:2, :]
    axis_masks = {}
    combo_masks = {(0, 0): None}

    def axis_mask(kind, v, d, n):
        key = (kind, d)
        if key not in axis_masks:
            axis_masks[key] = (v < n - d) if d > 0 else (v >= -d)
        return axis_masks[key]

    def mask_for(dy, dx):
        key = (dy, dx)
        if key not in combo_masks:
            m = None
            if dy:
                m = axis_mask('r', row, dy, H)
            if dx:
                cm = axis_mask('c', col, dx, W)
                m = cm if m is None else (m & cm)
            combo_masks[key] = m
        return combo_masks[key]

    def shift(p, dy, dx):
        # result[..., i] = p[..., i + dy*W + dx], zero outside the H x W image.
        off = dy * W + dx
        r = p if off == 0 else jnp.roll(p, -off, axis=1)
        m = mask_for(dy, dx)
        return r if m is None else jnp.where(m, r, 0.0)

    # ---- ASPP convs: shifted adds of precomputed single-plane taps --------------
    aspp2 = taps_ref[4:5, :]          # center tap, dilation 1 (no shift / mask)
    aspp3 = taps_ref[13:14, :]        # center tap, dilation 2
    for k in range(9):
        if k == 4:
            continue
        dy, dx = k // 3 - 1, k % 3 - 1
        aspp2 = aspp2 + shift(taps_ref[k:k + 1, :], dy, dx)               # dilation 1
        aspp3 = aspp3 + shift(taps_ref[k + 9:k + 10, :], 2 * dy, 2 * dx)  # dilation 2

    # x_compress = cat(max + aspp2, mean + aspp3) as one (2, HWp) slab
    planes = jnp.concatenate([cmax + aspp2, cmean + aspp3], axis=0)

    # ---- 3x3 spatial conv (2 -> 1), padding 1, no bias: shift both rows at once,
    #      weight per tap is a (2,1) column, then one sublane reduction -----------
    conv2 = planes * wsp_ref[:, 4:5]                       # center tap
    for k in range(9):
        if k == 4:
            continue
        dy, dx = k // 3 - 1, k % 3 - 1
        conv2 = conv2 + shift(planes, dy, dx) * wsp_ref[:, k:k + 1]
    conv = jnp.sum(conv2, axis=0, keepdims=True)           # (1, HWp)

    # ---- folded BatchNorm (inference) + SELU + sigmoid gate ----------------------
    y = conv * bn_ref[0] + bn_ref[1]
    selu = jnp.float32(SELU_SCALE) * jnp.where(
        y > 0, y, jnp.float32(SELU_ALPHA) * (jnp.exp(y) - 1.0))
    # EUP approx reciprocal only on the low-precision (bf16) path; exact for f32.
    gate = pl.reciprocal(1.0 + jnp.exp(-selu),
                         approx=(o_ref.dtype == jnp.bfloat16))        # (1, HWp)

    # ---- apply gate in the input dtype (bf16 stays bf16, halves VALU/vld traffic)
    o_ref[...] = (x_ref[...] * gate.astype(x_ref.dtype)).astype(o_ref.dtype)


def aspp_spatial_gate2(x, w_aspp2, w_aspp3, w_spatial,
                       bn_gamma, bn_beta, bn_mean, bn_var, eps=1e-5):
    N, C, H, W = x.shape
    HW = H * W
    HW_pad = _round_up(HW, 128)

    # MXU operand dtype follows x (bf16 inputs -> bf16 weights, f32 accumulate).
    w_dtype = jnp.float32 if x.dtype == jnp.float32 else x.dtype

    # Stacked ASPP weights + mean row -> (24, C): row k (=3*ky+kx) holds the C channel
    # weights of tap (ky,kx); rows 0..8 dilation 1, rows 9..17 dilation 2, row 18 = 1/C.
    wa = jnp.zeros((_TAPS_ROWS, C), jnp.float32)
    wa = wa.at[0:9, :].set(jnp.transpose(w_aspp2.reshape(C, 9)).astype(jnp.float32))
    wa = wa.at[9:18, :].set(jnp.transpose(w_aspp3.reshape(C, 9)).astype(jnp.float32))
    wa = wa.at[18, :].set(1.0 / C)          # channel mean rides on the MXU for free
    wa = wa.astype(w_dtype)

    wsp = w_spatial.reshape(2, 9).astype(jnp.float32)                # (in=2, tap=9)

    s = (bn_gamma / jnp.sqrt(bn_var + eps)).astype(jnp.float32)
    t = (bn_beta - s * bn_mean).astype(jnp.float32)
    bn = jnp.concatenate([s.reshape(-1), t.reshape(-1)])             # (2,)

    # row / col index planes (replaces per-step iota + integer divide in the kernel).
    idx = jnp.arange(HW_pad, dtype=jnp.int32)
    rowcol = jnp.stack([idx // W, idx % W], axis=0)                  # (2, HW_pad)

    # Lane-dense presentation: flatten spatial dims; pad to a lane multiple if needed.
    x_flat = x.reshape(N, C, HW)
    if HW_pad != HW:
        # TODO(synk): this pad materializes one extra HBM copy of x; keep H*W a multiple
        # of 128 upstream to get the unmasked lane-dense store for free.
        x_flat = jnp.pad(x_flat, ((0, 0), (0, 0), (0, HW_pad - HW)))

    kernel = functools.partial(aspp_spatial_gate2_kernel, H=H, W=W)

    # Explicit scoped-VMEM budget: x in + out (double-buffered) + taps scratch + planes.
    itemsize = x.dtype.itemsize
    est = (4 * C * HW_pad * itemsize        # x + out blocks, double-buffered
           + _TAPS_ROWS * HW_pad * 4        # taps scratch
           + 4 * HW_pad * 4                 # rowcol block (double-buffered)
           + 16 * HW_pad * 4)               # gate-path temporaries headroom
    vmem_limit = int(min(60 * 2 ** 20, max(32 * 2 ** 20, est * 3 // 2)))

    out_flat = pl.pallas_call(
        kernel,
        out_shape=jax.ShapeDtypeStruct((N, C, HW_pad), x.dtype),
        grid_spec=pltpu.PrefetchScalarGridSpec(
            num_scalar_prefetch=0,
            grid=(N,),
            in_specs=[
                pl.BlockSpec(memory_space=pltpu.MemorySpace.SMEM),        # bn scale/shift
                pl.BlockSpec((_TAPS_ROWS, C), lambda n: (0, 0)),          # aspp + mean w
                pl.BlockSpec((2, 9), lambda n: (0, 0)),                   # spatial conv w
                pl.BlockSpec((2, HW_pad), lambda n: (0, 0)),              # row/col planes
                pl.BlockSpec((pl.Squeezed(), C, HW_pad), lambda n: (n, 0, 0)),
            ],
            out_specs=pl.BlockSpec((pl.Squeezed(), C, HW_pad), lambda n: (n, 0, 0)),
            scratch_shapes=[pltpu.VMEM((_TAPS_ROWS, HW_pad), jnp.float32)],
        ),
        compiler_params=pltpu.CompilerParams(
            dimension_semantics=("parallel",),      # batch items independent
            vmem_limit_bytes=vmem_limit),
    )(bn, wa, wsp, rowcol, x_flat)

    out = out_flat[:, :, :HW] if HW_pad != HW else out_flat
    return out.reshape(N, C, H, W)


def _reference(x, w_aspp2, w_aspp3, w_spatial,
               bn_gamma, bn_beta, bn_mean, bn_var, eps=1e-5):
    """Pure-JAX reference mirroring the PyTorch forward (BN in eval mode)."""
    cmax = jnp.max(x, axis=1, keepdims=True)
    cmean = jnp.mean(x, axis=1, keepdims=True)
    dn = ("NCHW", "OIHW", "NCHW")
    a2 = lax.conv_general_dilated(x, w_aspp2, (1, 1), [(1, 1), (1, 1)],
                                  rhs_dilation=(1, 1), dimension_numbers=dn)
    a3 = lax.conv_general_dilated(x, w_aspp3, (1, 1), [(2, 2), (2, 2)],
                                  rhs_dilation=(2, 2), dimension_numbers=dn)
    comp = jnp.concatenate([cmax + a2, cmean + a3], axis=1)
    conv = lax.conv_general_dilated(comp, w_spatial, (1, 1), [(1, 1), (1, 1)],
                                    dimension_numbers=dn)
    bnm = bn_mean.reshape(1, -1, 1, 1)
    bnv = bn_var.reshape(1, -1, 1, 1)
    g = bn_gamma.reshape(1, -1, 1, 1)
    b = bn_beta.reshape(1, -1, 1, 1)
    y = (conv - bnm) / jnp.sqrt(bnv + eps) * g + b
    selu = SELU_SCALE * jnp.where(y > 0, y, SELU_ALPHA * (jnp.exp(y) - 1.0))
    return x * jax.nn.sigmoid(selu)


if __name__ == "__main__":
    key = jax.random.PRNGKey(0)
    kx, k2, k3, ks = jax.random.split(key, 4)

    N, C, H, W = 2, 4, 16, 16
    x = jax.random.normal(kx, (N, C, H, W), dtype=jnp.float32)
    w_aspp2 = jax.random.normal(k2, (1, C, 3, 3), jnp.float32) * (1.0 / math.sqrt(9 * C))
    w_aspp3 = jax.random.normal(k3, (1, C, 3, 3), jnp.float32) * (1.0 / math.sqrt(9 * C))
    w_spatial = jax.random.normal(ks, (1, 2, 3, 3), jnp.float32) * (1.0 / math.sqrt(18))

    # BatchNorm2d(1) running stats (eval mode), mildly non-trivial values.
    bn_gamma = jnp.array([1.2], jnp.float32)
    bn_beta = jnp.array([0.1], jnp.float32)
    bn_mean = jnp.array([0.05], jnp.float32)
    bn_var = jnp.array([0.9], jnp.float32)

    out = aspp_spatial_gate2(x, w_aspp2, w_aspp3, w_spatial,
                             bn_gamma, bn_beta, bn_mean, bn_var)
    out = jax.block_until_ready(out)

    ref = _reference(x, w_aspp2, w_aspp3, w_spatial,
                     bn_gamma, bn_beta, bn_mean, bn_var)
    assert out.shape == (N, C, H, W)
    err = float(jnp.max(jnp.abs(out - ref)))
    assert jnp.allclose(out, ref, atol=1e-4, rtol=1e-4), f"mismatch vs reference, max err {err}"

    print("KERNEL_OK")
</pallas_src>

<mosaic_0001>
module attributes {stable_mosaic.version = 11 : i64} {
  func.func @aspp_spatial_gate2_kernel(%arg0: i32, %arg1: memref<2xf32, #tpu.memory_space<smem>>, %arg2: memref<24x4xf32, #tpu.memory_space<vmem>>, %arg3: memref<2x9xf32, #tpu.memory_space<vmem>>, %arg4: memref<2x256xi32, #tpu.memory_space<vmem>>, %arg5: memref<1x4x256xf32, #tpu.memory_space<vmem>>, %arg6: memref<1x4x256xf32, #tpu.memory_space<vmem>>, %arg7: memref<24x256xf32, #tpu.memory_space<vmem>>) attributes {dimension_semantics = [#tpu.dimension_semantics<parallel>], iteration_bounds = array<i64: 2>, scalar_prefetch = 0 : i64, scratch_operands = 1 : i64, tpu.core_type = #tpu.core_type<tc>, window_params = [{transform_indices = @transform_0, window_bounds = array<i64: 2>}, {pipeline_mode = #tpu.pipeline_mode<synchronous>, transform_indices = @transform_1, window_bounds = array<i64: 24, 4>}, {pipeline_mode = #tpu.pipeline_mode<synchronous>, transform_indices = @transform_2, window_bounds = array<i64: 2, 9>}, {pipeline_mode = #tpu.pipeline_mode<synchronous>, transform_indices = @transform_3, window_bounds = array<i64: 2, 256>}, {transform_indices = @transform_4, window_bounds = array<i64: 1, 4, 256>}, {transform_indices = @transform_5, window_bounds = array<i64: 1, 4, 256>}]} {
    %c0 = arith.constant 0 : index
    %c0_0 = arith.constant 0 : index
    %0 = vector.load %arg2[%c0, %c0_0] : memref<24x4xf32, #tpu.memory_space<vmem>>, vector<24x4xf32>
    %c0_1 = arith.constant 0 : index
    %c0_2 = arith.constant 0 : index
    %c0_3 = arith.constant 0 : index
    %1 = vector.load %arg5[%c0_1, %c0_2, %c0_3] : memref<1x4x256xf32, #tpu.memory_space<vmem>>, vector<1x4x256xf32>
    %2 = vector.shape_cast %1 : vector<1x4x256xf32> to vector<4x256xf32>
    %cst = arith.constant dense<0.000000e+00> : vector<24x256xf32>
    %3 = tpu.matmul %0, %2, %cst {dimension_numbers = #tpu.dot_dimension_numbers<[1], [0], [0], [1], [0, 0, 1, 1], [], []>} : vector<24x4xf32>, vector<4x256xf32>, vector<24x256xf32> -> vector<24x256xf32>
    %c0_4 = arith.constant 0 : index
    %c0_5 = arith.constant 0 : index
    %4 = vector.load %arg7[%c0_4, %c0_5] : memref<24x256xf32, #tpu.memory_space<vmem>>, vector<24x256xf32>
    tpu.vector_store %arg7[%c0_4, %c0_5], %3 {strides = array<i32>} : memref<24x256xf32, #tpu.memory_space<vmem>>, vector<24x256xf32>,
    %c0_6 = arith.constant 0 : index
    %c0_7 = arith.constant 0 : index
    %c0_8 = arith.constant 0 : index
    %5 = vector.load %arg5[%c0_6, %c0_7, %c0_8] : memref<1x4x256xf32, #tpu.memory_space<vmem>>, vector<1x4x256xf32>
    %6 = vector.shape_cast %5 : vector<1x4x256xf32> to vector<4x256xf32>
    %cst_9 = arith.constant dense<0xFF800000> : vector<256xf32>
    %7 = vector.multi_reduction <maximumf>, %6, %cst_9 [0] : vector<4x256xf32> to vector<256xf32>
    %8 = vector.shape_cast %7 : vector<256xf32> to vector<1x256xf32>
    %c18 = arith.constant 18 : index
    %c0_10 = arith.constant 0 : index
    %9 = vector.load %arg7[%c18, %c0_10] : memref<24x256xf32, #tpu.memory_space<vmem>>, vector<1x256xf32>
    %c0_11 = arith.constant 0 : index
    %c0_12 = arith.constant 0 : index
    %10 = vector.load %arg4[%c0_11, %c0_12] : memref<2x256xi32, #tpu.memory_space<vmem>>, vector<1x256xi32>
    %c1 = arith.constant 1 : index
    %c0_13 = arith.constant 0 : index
    %11 = vector.load %arg4[%c1, %c0_13] : memref<2x256xi32, #tpu.memory_space<vmem>>, vector<1x256xi32>
    %c4 = arith.constant 4 : index
    %c0_14 = arith.constant 0 : index
    %12 = vector.load %arg7[%c4, %c0_14] : memref<24x256xf32, #tpu.memory_space<vmem>>, vector<1x256xf32>
    %c13 = arith.constant 13 : index
    %c0_15 = arith.constant 0 : index
    %13 = vector.load %arg7[%c13, %c0_15] : memref<24x256xf32, #tpu.memory_space<vmem>>, vector<1x256xf32>
    %c0_16 = arith.constant 0 : index
    %c0_17 = arith.constant 0 : index
    %14 = vector.load %arg7[%c0_16, %c0_17] : memref<24x256xf32, #tpu.memory_space<vmem>>, vector<1x256xf32>
    %15 = vector.extract_strided_slice %14 {offsets = [0, 239], sizes = [1, 17], strides = [1, 1]} : vector<1x256xf32> to vector<1x17xf32>
    %16 = vector.extract_strided_slice %14 {offsets = [0, 0], sizes = [1, 239], strides = [1, 1]} : vector<1x256xf32> to vector<1x239xf32>
    %17 = tpu.concatenate %15, %16 in 1 : vector<1x17xf32>, vector<1x239xf32> -> vector<1x256xf32>
    %c1_i32 = arith.constant 1 : i32
    %18 = vector.broadcast %c1_i32 : i32 to vector<1x256xi32>
    %19 = arith.cmpi sge, %10, %18 : vector<1x256xi32>
    %c1_i32_18 = arith.constant 1 : i32
    %20 = vector.broadcast %c1_i32_18 : i32 to vector<1x256xi32>
    %21 = arith.cmpi sge, %11, %20 : vector<1x256xi32>
    %22 = arith.andi %19, %21 : vector<1x256xi1>
    %cst_19 = arith.constant 0.000000e+00 : f32
    %23 = vector.broadcast %cst_19 : f32 to vector<1x256xf32>
    %24 = arith.select %22, %17, %23 : vector<1x256xi1>, vector<1x256xf32>
    %25 = arith.addf %12, %24 : vector<1x256xf32>
    %c9 = arith.constant 9 : index
    %c0_20 = arith.constant 0 : index
    %26 = vector.load %arg7[%c9, %c0_20] : memref<24x256xf32, #tpu.memory_space<vmem>>, vector<1x256xf32>
    %27 = vector.extract_strided_slice %26 {offsets = [0, 222], sizes = [1, 34], strides = [1, 1]} : vector<1x256xf32> to vector<1x34xf32>
    %28 = vector.extract_strided_slice %26 {offsets = [0, 0], sizes = [1, 222], strides = [1, 1]} : vector<1x256xf32> to vector<1x222xf32>
    %29 = tpu.concatenate %27, %28 in 1 : vector<1x34xf32>, vector<1x222xf32> -> vector<1x256xf32>
    %c2_i32 = arith.constant 2 : i32
    %30 = vector.broadcast %c2_i32 : i32 to vector<1x256xi32>
    %31 = arith.cmpi sge, %10, %30 : vector<1x256xi32>
    %c2_i32_21 = arith.constant 2 : i32
    %32 = vector.broadcast %c2_i32_21 : i32 to vector<1x256xi32>
    %33 = arith.cmpi sge, %11, %32 : vector<1x256xi32>
    %34 = arith.andi %31, %33 : vector<1x256xi1>
    %cst_22 = arith.constant 0.000000e+00 : f32
    %35 = vector.broadcast %cst_22 : f32 to vector<1x256xf32>
    %36 = arith.select %34, %29, %35 : vector<1x256xi1>, vector<1x256xf32>
    %37 = arith.addf %13, %36 : vector<1x256xf32>
    %c1_23 = arith.constant 1 : index
    %c0_24 = arith.constant 0 : index
    %38 = vector.load %arg7[%c1_23, %c0_24] : memref<24x256xf32, #tpu.memory_space<vmem>>, vector<1x256xf32>
    %39 = vector.extract_strided_slice %38 {offsets = [0, 240], sizes = [1, 16], strides = [1, 1]} : vector<1x256xf32> to vector<1x16xf32>
    %40 = vector.extract_strided_slice %38 {offsets = [0, 0], sizes = [1, 240], strides = [1, 1]} : vector<1x256xf32> to vector<1x240xf32>
    %41 = tpu.concatenate %39, %40 in 1 : vector<1x16xf32>, vector<1x240xf32> -> vector<1x256xf32>
    %cst_25 = arith.constant 0.000000e+00 : f32
    %42 = vector.broadcast %cst_25 : f32 to vector<1x256xf32>
    %43 = arith.select %19, %41, %42 : vector<1x256xi1>, vector<1x256xf32>
    %44 = arith.addf %25, %43 : vector<1x256xf32>
    %c10 = arith.constant 10 : index
    %c0_26 = arith.constant 0 : index
    %45 = vector.load %arg7[%c10, %c0_26] : memref<24x256xf32, #tpu.memory_space<vmem>>, vector<1x256xf32>
    %46 = vector.extract_strided_slice %45 {offsets = [0, 224], sizes = [1, 32], strides = [1, 1]} : vector<1x256xf32> to vector<1x32xf32>
    %47 = vector.extract_strided_slice %45 {offsets = [0, 0], sizes = [1, 224], strides = [1, 1]} : vector<1x256xf32> to vector<1x224xf32>
    %48 = tpu.concatenate %46, %47 in 1 : vector<1x32xf32>, vector<1x224xf32> -> vector<1x256xf32>
    %cst_27 = arith.constant 0.000000e+00 : f32
    %49 = vector.broadcast %cst_27 : f32 to vector<1x256xf32>
    %50 = arith.select %31, %48, %49 : vector<1x256xi1>, vector<1x256xf32>
    %51 = arith.addf %37, %50 : vector<1x256xf32>
    %c2 = arith.constant 2 : index
    %c0_28 = arith.constant 0 : index
    %52 = vector.load %arg7[%c2, %c0_28] : memref<24x256xf32, #tpu.memory_space<vmem>>, vector<1x256xf32>
    %53 = vector.extract_strided_slice %52 {offsets = [0, 241], sizes = [1, 15], strides = [1, 1]} : vector<1x256xf32> to vector<1x15xf32>
    %54 = vector.extract_strided_slice %52 {offsets = [0, 0], sizes = [1, 241], strides = [1, 1]} : vector<1x256xf32> to vector<1x241xf32>
    %55 = tpu.concatenate %53, %54 in 1 : vector<1x15xf32>, vector<1x241xf32> -> vector<1x256xf32>
    %c15_i32 = arith.constant 15 : i32
    %56 = vector.broadcast %c15_i32 : i32 to vector<1x256xi32>
    %57 = arith.cmpi slt, %11, %56 : vector<1x256xi32>
    %58 = arith.andi %19, %57 : vector<1x256xi1>
    %cst_29 = arith.constant 0.000000e+00 : f32
    %59 = vector.broadcast %cst_29 : f32 to vector<1x256xf32>
    %60 = arith.select %58, %55, %59 : vector<1x256xi1>, vector<1x256xf32>
    %61 = arith.addf %44, %60 : vector<1x256xf32>
    %c11 = arith.constant 11 : index
    %c0_30 = arith.constant 0 : index
    %62 = vector.load %arg7[%c11, %c0_30] : memref<24x256xf32, #tpu.memory_space<vmem>>, vector<1x256xf32>
    %63 = vector.extract_strided_slice %62 {offsets = [0, 226], sizes = [1, 30], strides = [1, 1]} : vector<1x256xf32> to vector<1x30xf32>
    %64 = vector.extract_strided_slice %62 {offsets = [0, 0], sizes = [1, 226], strides = [1, 1]} : vector<1x256xf32> to vector<1x226xf32>
    %65 = tpu.concatenate %63, %64 in 1 : vector<1x30xf32>, vector<1x226xf32> -> vector<1x256xf32>
    %c14_i32 = arith.constant 14 : i32
    %66 = vector.broadcast %c14_i32 : i32 to vector<1x256xi32>
    %67 = arith.cmpi slt, %11, %66 : vector<1x256xi32>
    %68 = arith.andi %31, %67 : vector<1x256xi1>
    %cst_31 = arith.constant 0.000000e+00 : f32
    %69 = vector.broadcast %cst_31 : f32 to vector<1x256xf32>
    %70 = arith.select %68, %65, %69 : vector<1x256xi1>, vector<1x256xf32>
    %71 = arith.addf %51, %70 : vector<1x256xf32>
    %c3 = arith.constant 3 : index
    %c0_32 = arith.constant 0 : index
    %72 = vector.load %arg7[%c3, %c0_32] : memref<24x256xf32, #tpu.memory_space<vmem>>, vector<1x256xf32>
    %73 = vector.extract_strided_slice %72 {offsets = [0, 255], sizes = [1, 1], strides = [1, 1]} : vector<1x256xf32> to vector<1x1xf32>
    %74 = vector.extract_strided_slice %72 {offsets = [0, 0], sizes = [1, 255], strides = [1, 1]} : vector<1x256xf32> to vector<1x255xf32>
    %75 = tpu.concatenate %73, %74 in 1 : vector<1x1xf32>, vector<1x255xf32> -> vector<1x256xf32>
    %cst_33 = arith.constant 0.000000e+00 : f32
    %76 = vector.broadcast %cst_33 : f32 to vector<1x256xf32>
    %77 = arith.select %21, %75, %76 : vector<1x256xi1>, vector<1x256xf32>
    %78 = arith.addf %61, %77 : vector<1x256xf32>
    %c12 = arith.constant 12 : index
    %c0_34 = arith.constant 0 : index
    %79 = vector.load %arg7[%c12, %c0_34] : memref<24x256xf32, #tpu.memory_space<vmem>>, vector<1x256xf32>
    %80 = vector.extract_strided_slice %79 {offsets = [0, 254], sizes = [1, 2], strides = [1, 1]} : vector<1x256xf32> to vector<1x2xf32>
    %81 = vector.extract_strided_slice %79 {offsets = [0, 0], sizes = [1, 254], strides = [1, 1]} : vector<1x256xf32> to vector<1x254xf32>
    %82 = tpu.concatenate %80, %81 in 1 : vector<1x2xf32>, vector<1x254xf32> -> vector<1x256xf32>
    %cst_35 = arith.constant 0.000000e+00 : f32
    %83 = vector.broadcast %cst_35 : f32 to vector<1x256xf32>
    %84 = arith.select %33, %82, %83 : vector<1x256xi1>, vector<1x256xf32>
    %85 = arith.addf %71, %84 : vector<1x256xf32>
    %c5 = arith.constant 5 : index
    %c0_36 = arith.constant 0 : index
    %86 = vector.load %arg7[%c5, %c0_36] : memref<24x256xf32, #tpu.memory_space<vmem>>, vector<1x256xf32>
    %87 = vector.extract_strided_slice %86 {offsets = [0, 1], sizes = [1, 255], strides = [1, 1]} : vector<1x256xf32> to vector<1x255xf32>
    %88 = vector.extract_strided_slice %86 {offsets = [0, 0], sizes = [1, 1], strides = [1, 1]} : vector<1x256xf32> to vector<1x1xf32>
    %89 = tpu.concatenate %87, %88 in 1 : vector<1x255xf32>, vector<1x1xf32> -> vector<1x256xf32>
    %cst_37 = arith.constant 0.000000e+00 : f32
    %90 = vector.broadcast %cst_37 : f32 to vector<1x256xf32>
    %91 = arith.select %57, %89, %90 : vector<1x256xi1>, vector<1x256xf32>
    %92 = arith.addf %78, %91 : vector<1x256xf32>
    %c14 = arith.constant 14 : index
    %c0_38 = arith.constant 0 : index
    %93 = vector.load %arg7[%c14, %c0_38] : memref<24x256xf32, #tpu.memory_space<vmem>>, vector<1x256xf32>
    %94 = vector.extract_strided_slice %93 {offsets = [0, 2], sizes = [1, 254], strides = [1, 1]} : vector<1x256xf32> to vector<1x254xf32>
    %95 = vector.extract_strided_slice %93 {offsets = [0, 0], sizes = [1, 2], strides = [1, 1]} : vector<1x256xf32> to vector<1x2xf32>
    %96 = tpu.concatenate %94, %95 in 1 : vector<1x254xf32>, vector<1x2xf32> -> vector<1x256xf32>
    %cst_39 = arith.constant 0.000000e+00 : f32
    %97 = vector.broadcast %cst_39 : f32 to vector<1x256xf32>
    %98 = arith.select %67, %96, %97 : vector<1x256xi1>, vector<1x256xf32>
    %99 = arith.addf %85, %98 : vector<1x256xf32>
    %c6 = arith.constant 6 : index
    %c0_40 = arith.constant 0 : index
    %100 = vector.load %arg7[%c6, %c0_40] : memref<24x256xf32, #tpu.memory_space<vmem>>, vector<1x256xf32>
    %101 = vector.extract_strided_slice %100 {offsets = [0, 15], sizes = [1, 241], strides = [1, 1]} : vector<1x256xf32> to vector<1x241xf32>
    %102 = vector.extract_strided_slice %100 {offsets = [0, 0], sizes = [1, 15], strides = [1, 1]} : vector<1x256xf32> to vector<1x15xf32>
    %103 = tpu.concatenate %101, %102 in 1 : vector<1x241xf32>, vector<1x15xf32> -> vector<1x256xf32>
    %c15_i32_41 = arith.constant 15 : i32
    %104 = vector.broadcast %c15_i32_41 : i32 to vector<1x256xi32>
    %105 = arith.cmpi slt, %10, %104 : vector<1x256xi32>
    %106 = arith.andi %105, %21 : vector<1x256xi1>
    %cst_42 = arith.constant 0.000000e+00 : f32
    %107 = vector.broadcast %cst_42 : f32 to vector<1x256xf32>
    %108 = arith.select %106, %103, %107 : vector<1x256xi1>, vector<1x256xf32>
    %109 = arith.addf %92, %108 : vector<1x256xf32>
    %c15 = arith.constant 15 : index
    %c0_43 = arith.constant 0 : index
    %110 = vector.load %arg7[%c15, %c0_43] : memref<24x256xf32, #tpu.memory_space<vmem>>, vector<1x256xf32>
    %111 = vector.extract_strided_slice %110 {offsets = [0, 30], sizes = [1, 226], strides = [1, 1]} : vector<1x256xf32> to vector<1x226xf32>
    %112 = vector.extract_strided_slice %110 {offsets = [0, 0], sizes = [1, 30], strides = [1, 1]} : vector<1x256xf32> to vector<1x30xf32>
    %113 = tpu.concatenate %111, %112 in 1 : vector<1x226xf32>, vector<1x30xf32> -> vector<1x256xf32>
    %c14_i32_44 = arith.constant 14 : i32
    %114 = vector.broadcast %c14_i32_44 : i32 to vector<1x256xi32>
    %115 = arith.cmpi slt, %10, %114 : vector<1x256xi32>
    %116 = arith.andi %115, %33 : vector<1x256xi1>
    %cst_45 = arith.constant 0.000000e+00 : f32
    %117 = vector.broadcast %cst_45 : f32 to vector<1x256xf32>
    %118 = arith.select %116, %113, %117 : vector<1x256xi1>, vector<1x256xf32>
    %119 = arith.addf %99, %118 : vector<1x256xf32>
    %c7 = arith.constant 7 : index
    %c0_46 = arith.constant 0 : index
    %120 = vector.load %arg7[%c7, %c0_46] : memref<24x256xf32, #tpu.memory_space<vmem>>, vector<1x256xf32>
    %121 = vector.extract_strided_slice %120 {offsets = [0, 16], sizes = [1, 240], strides = [1, 1]} : vector<1x256xf32> to vector<1x240xf32>
    %122 = vector.extract_strided_slice %120 {offsets = [0, 0], sizes = [1, 16], strides = [1, 1]} : vector<1x256xf32> to vector<1x16xf32>
    %123 = tpu.concatenate %121, %122 in 1 : vector<1x240xf32>, vector<1x16xf32> -> vector<1x256xf32>
    %cst_47 = arith.constant 0.000000e+00 : f32
    %124 = vector.broadcast %cst_47 : f32 to vector<1x256xf32>
    %125 = arith.select %105, %123, %124 : vector<1x256xi1>, vector<1x256xf32>
    %126 = arith.addf %109, %125 : vector<1x256xf32>
    %c16 = arith.constant 16 : index
    %c0_48 = arith.constant 0 : index
    %127 = vector.load %arg7[%c16, %c0_48] : memref<24x256xf32, #tpu.memory_space<vmem>>, vector<1x256xf32>
    %128 = vector.extract_strided_slice %127 {offsets = [0, 32], sizes = [1, 224], strides = [1, 1]} : vector<1x256xf32> to vector<1x224xf32>
    %129 = vector.extract_strided_slice %127 {offsets = [0, 0], sizes = [1, 32], strides = [1, 1]} : vector<1x256xf32> to vector<1x32xf32>
    %130 = tpu.concatenate %128, %129 in 1 : vector<1x224xf32>, vector<1x32xf32> -> vector<1x256xf32>
    %cst_49 = arith.constant 0.000000e+00 : f32
    %131 = vector.broadcast %cst_49 : f32 to vector<1x256xf32>
    %132 = arith.select %115, %130, %131 : vector<1x256xi1>, vector<1x256xf32>
    %133 = arith.addf %119, %132 : vector<1x256xf32>
    %c8 = arith.constant 8 : index
    %c0_50 = arith.constant 0 : index
    %134 = vector.load %arg7[%c8, %c0_50] : memref<24x256xf32, #tpu.memory_space<vmem>>, vector<1x256xf32>
    %135 = vector.extract_strided_slice %134 {offsets = [0, 17], sizes = [1, 239], strides = [1, 1]} : vector<1x256xf32> to vector<1x239xf32>
    %136 = vector.extract_strided_slice %134 {offsets = [0, 0], sizes = [1, 17], strides = [1, 1]} : vector<1x256xf32> to vector<1x17xf32>
    %137 = tpu.concatenate %135, %136 in 1 : vector<1x239xf32>, vector<1x17xf32> -> vector<1x256xf32>
    %138 = arith.andi %105, %57 : vector<1x256xi1>
    %cst_51 = arith.constant 0.000000e+00 : f32
    %139 = vector.broadcast %cst_51 : f32 to vector<1x256xf32>
    %140 = arith.select %138, %137, %139 : vector<1x256xi1>, vector<1x256xf32>
    %141 = arith.addf %126, %140 : vector<1x256xf32>
    %c17 = arith.constant 17 : index
    %c0_52 = arith.constant 0 : index
    %142 = vector.load %arg7[%c17, %c0_52] : memref<24x256xf32, #tpu.memory_space<vmem>>, vector<1x256xf32>
    %143 = vector.extract_strided_slice %142 {offsets = [0, 34], sizes = [1, 222], strides = [1, 1]} : vector<1x256xf32> to vector<1x222xf32>
    %144 = vector.extract_strided_slice %142 {offsets = [0, 0], sizes = [1, 34], strides = [1, 1]} : vector<1x256xf32> to vector<1x34xf32>
    %145 = tpu.concatenate %143, %144 in 1 : vector<1x222xf32>, vector<1x34xf32> -> vector<1x256xf32>
    %146 = arith.andi %115, %67 : vector<1x256xi1>
    %cst_53 = arith.constant 0.000000e+00 : f32
    %147 = vector.broadcast %cst_53 : f32 to vector<1x256xf32>
    %148 = arith.select %146, %145, %147 : vector<1x256xi1>, vector<1x256xf32>
    %149 = arith.addf %133, %148 : vector<1x256xf32>
    %150 = arith.addf %8, %141 : vector<1x256xf32>
    %151 = arith.addf %9, %149 : vector<1x256xf32>
    %152 = tpu.concatenate %150, %151 in 0 : vector<1x256xf32>, vector<1x256xf32> -> vector<2x256xf32>
    %c0_54 = arith.constant 0 : index
    %c4_55 = arith.constant 4 : index
    %153 = vector.load %arg3[%c0_54, %c4_55] : memref<2x9xf32, #tpu.memory_space<vmem>>, vector<2x1xf32>
    %154 = vector.broadcast %153 : vector<2x1xf32> to vector<2x256xf32>
    %155 = arith.mulf %152, %154 : vector<2x256xf32>
    %156 = vector.extract_strided_slice %152 {offsets = [0, 239], sizes = [2, 17], strides = [1, 1]} : vector<2x256xf32> to vector<2x17xf32>
    %157 = vector.extract_strided_slice %152 {offsets = [0, 0], sizes = [2, 239], strides = [1, 1]} : vector<2x256xf32> to vector<2x239xf32>
    %158 = tpu.concatenate %156, %157 in 1 : vector<2x17xf32>, vector<2x239xf32> -> vector<2x256xf32>
    %cst_56 = arith.constant 0.000000e+00 : f32
    %159 = vector.shape_cast %22 : vector<1x256xi1> to vector<1x256xi1>
    %160 = vector.broadcast %159 : vector<1x256xi1> to vector<2x256xi1>
    %161 = vector.broadcast %cst_56 : f32 to vector<2x256xf32>
    %162 = arith.select %160, %158, %161 : vector<2x256xi1>, vector<2x256xf32>
    %c0_57 = arith.constant 0 : index
    %c0_58 = arith.constant 0 : index
    %163 = vector.load %arg3[%c0_57, %c0_58] : memref<2x9xf32, #tpu.memory_space<vmem>>, vector<2x1xf32>
    %164 = vector.broadcast %163 : vector<2x1xf32> to vector<2x256xf32>
    %165 = arith.mulf %162, %164 : vector<2x256xf32>
    %166 = arith.addf %155, %165 : vector<2x256xf32>
    %167 = vector.extract_strided_slice %152 {offsets = [0, 240], sizes = [2, 16], strides = [1, 1]} : vector<2x256xf32> to vector<2x16xf32>
    %168 = vector.extract_strided_slice %152 {offsets = [0, 0], sizes = [2, 240], strides = [1, 1]} : vector<2x256xf32> to vector<2x240xf32>
    %169 = tpu.concatenate %167, %168 in 1 : vector<2x16xf32>, vector<2x240xf32> -> vector<2x256xf32>
    %cst_59 = arith.constant 0.000000e+00 : f32
    %170 = vector.shape_cast %19 : vector<1x256xi1> to vector<1x256xi1>
    %171 = vector.broadcast %170 : vector<1x256xi1> to vector<2x256xi1>
    %172 = vector.broadcast %cst_59 : f32 to vector<2x256xf32>
    %173 = arith.select %171, %169, %172 : vector<2x256xi1>, vector<2x256xf32>
    %c0_60 = arith.constant 0 : index
    %c1_61 = arith.constant 1 : index
    %174 = vector.load %arg3[%c0_60, %c1_61] : memref<2x9xf32, #tpu.memory_space<vmem>>, vector<2x1xf32>
    %175 = vector.broadcast %174 : vector<2x1xf32> to vector<2x256xf32>
    %176 = arith.mulf %173, %175 : vector<2x256xf32>
    %177 = arith.addf %166, %176 : vector<2x256xf32>
    %178 = vector.extract_strided_slice %152 {offsets = [0, 241], sizes = [2, 15], strides = [1, 1]} : vector<2x256xf32> to vector<2x15xf32>
    %179 = vector.extract_strided_slice %152 {offsets = [0, 0], sizes = [2, 241], strides = [1, 1]} : vector<2x256xf32> to vector<2x241xf32>
    %180 = tpu.concatenate %178, %179 in 1 : vector<2x15xf32>, vector<2x241xf32> -> vector<2x256xf32>
    %cst_62 = arith.constant 0.000000e+00 : f32
    %181 = vector.shape_cast %58 : vector<1x256xi1> to vector<1x256xi1>
    %182 = vector.broadcast %181 : vector<1x256xi1> to vector<2x256xi1>
    %183 = vector.broadcast %cst_62 : f32 to vector<2x256xf32>
    %184 = arith.select %182, %180, %183 : vector<2x256xi1>, vector<2x256xf32>
    %c0_63 = arith.constant 0 : index
    %c2_64 = arith.constant 2 : index
    %185 = vector.load %arg3[%c0_63, %c2_64] : memref<2x9xf32, #tpu.memory_space<vmem>>, vector<2x1xf32>
    %186 = vector.broadcast %185 : vector<2x1xf32> to vector<2x256xf32>
    %187 = arith.mulf %184, %186 : vector<2x256xf32>
    %188 = arith.addf %177, %187 : vector<2x256xf32>
    %189 = vector.extract_strided_slice %152 {offsets = [0, 255], sizes = [2, 1], strides = [1, 1]} : vector<2x256xf32> to vector<2x1xf32>
    %190 = vector.extract_strided_slice %152 {offsets = [0, 0], sizes = [2, 255], strides = [1, 1]} : vector<2x256xf32> to vector<2x255xf32>
    %191 = tpu.concatenate %189, %190 in 1 : vector<2x1xf32>, vector<2x255xf32> -> vector<2x256xf32>
    %cst_65 = arith.constant 0.000000e+00 : f32
    %192 = vector.shape_cast %21 : vector<1x256xi1> to vector<1x256xi1>
    %193 = vector.broadcast %192 : vector<1x256xi1> to vector<2x256xi1>
    %194 = vector.broadcast %cst_65 : f32 to vector<2x256xf32>
    %195 = arith.select %193, %191, %194 : vector<2x256xi1>, vector<2x256xf32>
    %c0_66 = arith.constant 0 : index
    %c3_67 = arith.constant 3 : index
    %196 = vector.load %arg3[%c0_66, %c3_67] : memref<2x9xf32, #tpu.memory_space<vmem>>, vector<2x1xf32>
    %197 = vector.broadcast %196 : vector<2x1xf32> to vector<2x256xf32>
    %198 = arith.mulf %195, %197 : vector<2x256xf32>
    %199 = arith.addf %188, %198 : vector<2x256xf32>
    %200 = vector.extract_strided_slice %152 {offsets = [0, 1], sizes = [2, 255], strides = [1, 1]} : vector<2x256xf32> to vector<2x255xf32>
    %201 = vector.extract_strided_slice %152 {offsets = [0, 0], sizes = [2, 1], strides = [1, 1]} : vector<2x256xf32> to vector<2x1xf32>
    %202 = tpu.concatenate %200, %201 in 1 : vector<2x255xf32>, vector<2x1xf32> -> vector<2x256xf32>
    %cst_68 = arith.constant 0.000000e+00 : f32
    %203 = vector.shape_cast %57 : vector<1x256xi1> to vector<1x256xi1>
    %204 = vector.broadcast %203 : vector<1x256xi1> to vector<2x256xi1>
    %205 = vector.broadcast %cst_68 : f32 to vector<2x256xf32>
    %206 = arith.select %204, %202, %205 : vector<2x256xi1>, vector<2x256xf32>
    %c0_69 = arith.constant 0 : index
    %c5_70 = arith.constant 5 : index
    %207 = vector.load %arg3[%c0_69, %c5_70] : memref<2x9xf32, #tpu.memory_space<vmem>>, vector<2x1xf32>
    %208 = vector.broadcast %207 : vector<2x1xf32> to vector<2x256xf32>
    %209 = arith.mulf %206, %208 : vector<2x256xf32>
    %210 = arith.addf %199, %209 : vector<2x256xf32>
    %211 = vector.extract_strided_slice %152 {offsets = [0, 15], sizes = [2, 241], strides = [1, 1]} : vector<2x256xf32> to vector<2x241xf32>
    %212 = vector.extract_strided_slice %152 {offsets = [0, 0], sizes = [2, 15], strides = [1, 1]} : vector<2x256xf32> to vector<2x15xf32>
    %213 = tpu.concatenate %211, %212 in 1 : vector<2x241xf32>, vector<2x15xf32> -> vector<2x256xf32>
    %cst_71 = arith.constant 0.000000e+00 : f32
    %214 = vector.shape_cast %106 : vector<1x256xi1> to vector<1x256xi1>
    %215 = vector.broadcast %214 : vector<1x256xi1> to vector<2x256xi1>
    %216 = vector.broadcast %cst_71 : f32 to vector<2x256xf32>
    %217 = arith.select %215, %213, %216 : vector<2x256xi1>, vector<2x256xf32>
    %c0_72 = arith.constant 0 : index
    %c6_73 = arith.constant 6 : index
    %218 = vector.load %arg3[%c0_72, %c6_73] : memref<2x9xf32, #tpu.memory_space<vmem>>, vector<2x1xf32>
    %219 = vector.broadcast %218 : vector<2x1xf32> to vector<2x256xf32>
    %220 = arith.mulf %217, %219 : vector<2x256xf32>
    %221 = arith.addf %210, %220 : vector<2x256xf32>
    %222 = vector.extract_strided_slice %152 {offsets = [0, 16], sizes = [2, 240], strides = [1, 1]} : vector<2x256xf32> to vector<2x240xf32>
    %223 = vector.extract_strided_slice %152 {offsets = [0, 0], sizes = [2, 16], strides = [1, 1]} : vector<2x256xf32> to vector<2x16xf32>
    %224 = tpu.concatenate %222, %223 in 1 : vector<2x240xf32>, vector<2x16xf32> -> vector<2x256xf32>
    %cst_74 = arith.constant 0.000000e+00 : f32
    %225 = vector.shape_cast %105 : vector<1x256xi1> to vector<1x256xi1>
    %226 = vector.broadcast %225 : vector<1x256xi1> to vector<2x256xi1>
    %227 = vector.broadcast %cst_74 : f32 to vector<2x256xf32>
    %228 = arith.select %226, %224, %227 : vector<2x256xi1>, vector<2x256xf32>
    %c0_75 = arith.constant 0 : index
    %c7_76 = arith.constant 7 : index
    %229 = vector.load %arg3[%c0_75, %c7_76] : memref<2x9xf32, #tpu.memory_space<vmem>>, vector<2x1xf32>
    %230 = vector.broadcast %229 : vector<2x1xf32> to vector<2x256xf32>
    %231 = arith.mulf %228, %230 : vector<2x256xf32>
    %232 = arith.addf %221, %231 : vector<2x256xf32>
    %233 = vector.extract_strided_slice %152 {offsets = [0, 17], sizes = [2, 239], strides = [1, 1]} : vector<2x256xf32> to vector<2x239xf32>
    %234 = vector.extract_strided_slice %152 {offsets = [0, 0], sizes = [2, 17], strides = [1, 1]} : vector<2x256xf32> to vector<2x17xf32>
    %235 = tpu.concatenate %233, %234 in 1 : vector<2x239xf32>, vector<2x17xf32> -> vector<2x256xf32>
    %cst_77 = arith.constant 0.000000e+00 : f32
    %236 = vector.shape_cast %138 : vector<1x256xi1> to vector<1x256xi1>
    %237 = vector.broadcast %236 : vector<1x256xi1> to vector<2x256xi1>
    %238 = vector.broadcast %cst_77 : f32 to vector<2x256xf32>
    %239 = arith.select %237, %235, %238 : vector<2x256xi1>, vector<2x256xf32>
    %c0_78 = arith.constant 0 : index
    %c8_79 = arith.constant 8 : index
    %240 = vector.load %arg3[%c0_78, %c8_79] : memref<2x9xf32, #tpu.memory_space<vmem>>, vector<2x1xf32>
    %241 = vector.broadcast %240 : vector<2x1xf32> to vector<2x256xf32>
    %242 = arith.mulf %239, %241 : vector<2x256xf32>
    %243 = arith.addf %232, %242 : vector<2x256xf32>
    %cst_80 = arith.constant dense<0.000000e+00> : vector<256xf32>
    %244 = vector.multi_reduction <add>, %243, %cst_80 [0] : vector<2x256xf32> to vector<256xf32>
    %245 = vector.shape_cast %244 : vector<256xf32> to vector<1x256xf32>
    %c0_81 = arith.constant 0 : index
    %246 = memref.load %arg1[%c0_81] : memref<2xf32, #tpu.memory_space<smem>>
    %247 = vector.broadcast %246 : f32 to vector<1x256xf32>
    %248 = arith.mulf %245, %247 : vector<1x256xf32>
    %c1_82 = arith.constant 1 : index
    %249 = memref.load %arg1[%c1_82] : memref<2xf32, #tpu.memory_space<smem>>
    %250 = vector.broadcast %249 : f32 to vector<1x256xf32>
    %251 = arith.addf %248, %250 : vector<1x256xf32>
    %cst_83 = arith.constant 0.000000e+00 : f32
    %252 = vector.broadcast %cst_83 : f32 to vector<1x256xf32>
    %253 = arith.cmpf ogt, %251, %252 : vector<1x256xf32>
    %254 = math.exp %251 : vector<1x256xf32>
    %cst_84 = arith.constant 1.000000e+00 : f32
    %255 = vector.broadcast %cst_84 : f32 to vector<1x256xf32>
    %256 = arith.subf %254, %255 : vector<1x256xf32>
    %cst_85 = arith.constant 1.67326319 : f32
    %257 = vector.broadcast %cst_85 : f32 to vector<1x256xf32>
    %258 = arith.mulf %257, %256 : vector<1x256xf32>
    %259 = arith.select %253, %251, %258 : vector<1x256xi1>, vector<1x256xf32>
    %cst_86 = arith.constant 1.05070102 : f32
    %260 = vector.broadcast %cst_86 : f32 to vector<1x256xf32>
    %261 = arith.mulf %260, %259 : vector<1x256xf32>
    %cst_87 = arith.constant 0.000000e+00 : f32
    %262 = vector.broadcast %cst_87 : f32 to vector<1x256xf32>
    %263 = arith.subf %262, %261 : vector<1x256xf32>
    %264 = math.exp %263 : vector<1x256xf32>
    %cst_88 = arith.constant 1.000000e+00 : f32
    %265 = vector.broadcast %cst_88 : f32 to vector<1x256xf32>
    %266 = arith.addf %265, %264 : vector<1x256xf32>
    %267 = tpu.reciprocal %266 : vector<1x256xf32> -> vector<1x256xf32>
    %c0_89 = arith.constant 0 : index
    %c0_90 = arith.constant 0 : index
    %c0_91 = arith.constant 0 : index
    %268 = vector.load %arg5[%c0_89, %c0_90, %c0_91] : memref<1x4x256xf32, #tpu.memory_space<vmem>>, vector<1x4x256xf32>
    %269 = vector.shape_cast %268 : vector<1x4x256xf32> to vector<4x256xf32>
    %270 = vector.broadcast %267 : vector<1x256xf32> to vector<4x256xf32>
    %271 = arith.mulf %269, %270 : vector<4x256xf32>
    %c0_92 = arith.constant 0 : index
    %c0_93 = arith.constant 0 : index
    %c0_94 = arith.constant 0 : index
    %272 = vector.load %arg6[%c0_92, %c0_93, %c0_94] : memref<1x4x256xf32, #tpu.memory_space<vmem>>, vector<1x4x256xf32>
    %273 = vector.shape_cast %272 : vector<1x4x256xf32> to vector<4x256xf32>
    %274 = vector.shape_cast %271 : vector<4x256xf32> to vector<1x4x256xf32>
    tpu.vector_store %arg6[%c0_92, %c0_93, %c0_94], %274 {strides = array<i32>} : memref<1x4x256xf32, #tpu.memory_space<vmem>>, vector<1x4x256xf32>,
    return
  }
  func.func @transform_0(%arg0: i32) -> i32 {
    %c0_i32 = arith.constant 0 : i32
    %c0_i32_0 = arith.constant 0 : i32
    return %c0_i32 : i32
  }
  func.func @transform_1(%arg0: i32) -> (i32, i32) {
    %c0_i32 = arith.constant 0 : i32
    %c0_i32_0 = arith.constant 0 : i32
    %c0_i32_1 = arith.constant 0 : i32
    return %c0_i32, %c0_i32_0 : i32, i32
  }
  func.func @transform_2(%arg0: i32) -> (i32, i32) {
    %c0_i32 = arith.constant 0 : i32
    %c0_i32_0 = arith.constant 0 : i32
    %c0_i32_1 = arith.constant 0 : i32
    return %c0_i32, %c0_i32_0 : i32, i32
  }
  func.func @transform_3(%arg0: i32) -> (i32, i32) {
    %c0_i32 = arith.constant 0 : i32
    %c0_i32_0 = arith.constant 0 : i32
    %c0_i32_1 = arith.constant 0 : i32
    return %c0_i32, %c0_i32_0 : i32, i32
  }
  func.func @transform_4(%arg0: i32) -> (i32, i32, i32) {
    %c0_i32 = arith.constant 0 : i32
    %c0_i32_0 = arith.constant 0 : i32
    %c0_i32_1 = arith.constant 0 : i32
    return %arg0, %c0_i32, %c0_i32_0 : i32, i32, i32
  }
  func.func @transform_5(%arg0: i32) -> (i32, i32, i32) {
    %c0_i32 = arith.constant 0 : i32
    %c0_i32_0 = arith.constant 0 : i32
    %c0_i32_1 = arith.constant 0 : i32
    return %arg0, %c0_i32, %c0_i32_0 : i32, i32, i32
  }
}

</mosaic_0001>

<llo_original>
// kernel: tpu_custom_call.1
$region0: #{tpu_custom_call.1}
  #allocation0 [shape = 'u32[]', space=smem, size = 0x4, offset = 0x4, fixed_abs, tag = 'smem constant byte address 0x4 - core index']
  #allocation1 [shape = 'u32[144,128]{1,0:T(1,128)}', space=vmem, size = 0x12000, scoped, tag = 'internal scratch']
  #allocation2 [shape = 'f32[24,256]{1,0:T(8,128)}', space=vmem, size = 0x6000, scoped, tag = 'scratch operand']
  %s0 = inlined_call_operand.vmem [shape: f32[2], index: 0, kind: input, shape index: {}]
  %s1 = inlined_call_operand.vmem [shape: f32[24,4], index: 1, kind: input, shape index: {}]
  %s2 = inlined_call_operand.vmem [shape: f32[2,9], index: 2, kind: input, shape index: {}]
  %s3 = inlined_call_operand.vmem [shape: s32[2,256], index: 3, kind: input, shape index: {}]
  %s4 = inlined_call_operand.vmem [shape: f32[2,4,256], index: 4, kind: input, shape index: {}]
  %s5 = inlined_call_operand.hbm [shape: f32[2,4,256], index: 5, kind: output, shape index: {}]
  %s6 = sld [smem:[#allocation0]]
  $region57: #{tpu_custom_call.1} parent=0
    _
  %s8 = ssub.s32 1, %s6
  %s9 = scalar_select 0, %s8, %s6
  $region1: #{tpu_custom_call.1} parent=0
    #allocation3 [shape = 'u8[512]{0}', space=smem, size = 0x200, scoped, tag = 'input window, operand 0, single buffered']
    #allocation4 [shape = 's32[2]{0}', space=sflag, size = 0x8, scoped, tag = 'scoped memory for tpu_custom_call.1']
    #allocation5 [shape = 's32[2]{0}', space=sflag, size = 0x8, scoped, tag = 'scoped memory for tpu_custom_call.1']
    #allocation6 [shape = 'u8[8192]{0}', space=vmem, size = 0x2000, scoped, tag = 'output window, operand 0']
    %10 = vsyncpa [#allocation5], 0
    %11 = vsyncpa [#allocation4], 0
    %s12 = scalar_lea.sflag [#allocation4], 1
    %13 = vsyncpa %s12, 0
    loop: start=0, step=1, limit=4
    $region2: #{tpu_custom_call.1} parent=1 // loop_pre_header
      _
    $region3: #{tpu_custom_call.1} parent=1 // loop_header
      %s15 = sphi 0, %s19
      %p16 = scmp.ge.s32.totalorder %s15, 4
      %s23 = sphi 0, %s23
      %s25 = sphi 0, %s23
      %s26 = sphi 0, %s25
      %s40 = sphi 0, %s26
      %s44 = sphi 0, %s44
      %s46 = sphi 0, %s44
      %s47 = sphi 0, %s46
      %s61 = sphi 0, %s47
      %s65 = sphi 0, %s65
      %s67 = sphi 0, %s65
      %s68 = sphi 0, %s67
      %s82 = sphi 0, %s68
      %s86 = sphi 0, %s86
      %s88 = sphi 0, %s86
      %s89 = sphi 0, %s88
      %s103 = sphi 0, %s89
      %s109 = sphi 0, %s111
      %s112 = sphi 0, %s109
      %s113 = sphi 0, %s112
      %s129 = sphi 0, %s113
      %s135 = sphi 0, %s137
      %s138 = sphi 0, %s135
      %s139 = sphi 0, %s138
      %s155 = sphi 0, %s139
    $region4: #{tpu_custom_call.1} parent=1 // loop_header_branch
      %18 = sbr.rel (%p16) target = $region8
    $region5: #{tpu_custom_call.1} parent=1 // loop_body
      %s20 = ssub.s32 %s15, 1
      %s21 = ssub.s32 %s15, 2
      %s22 = sadd.s32 %s15, 1
      %s24 = sadd.s32 %s23, 1
      %p27 = scmp.eq.s32.totalorder %s15, 1
      %p28 = scmp.ne.s32.totalorder %s23, %s25
      %p29 = scmp.eq.s32.totalorder %s15, 0
      %p30 = por %p28, %p29
      %p31 = scmp.ne.s32.totalorder %s23, %s25
      %p32 = scmp.eq.s32.totalorder %s20, 1
      %p33 = por %p31, %p32
      %p34 = scmp.ne.s32.totalorder %s25, %s26
      %p35 = scmp.eq.s32.totalorder %s20, 0
      %p36 = por %p34, %p35
      %p37 = scmp.ne.s32.totalorder %s25, %s26
      %p38 = scmp.eq.s32.totalorder %s21, 1
      %p39 = por %p37, %p38
      %p41 = scmp.ne.s32.totalorder %s26, %s40
      %p42 = scmp.eq.s32.totalorder %s21, 0
      %p43 = por %p41, %p42
      %s45 = sadd.s32 %s44, 1
      %p48 = scmp.eq.s32.totalorder %s15, 1
      %p49 = scmp.ne.s32.totalorder %s44, %s46
      %p50 = scmp.eq.s32.totalorder %s15, 0
      %p51 = por %p49, %p50
      %p52 = scmp.ne.s32.totalorder %s44, %s46
      %p53 = scmp.eq.s32.totalorder %s20, 1
      %p54 = por %p52, %p53
      %p55 = scmp.ne.s32.totalorder %s46, %s47
      %p56 = scmp.eq.s32.totalorder %s20, 0
      %p57 = por %p55, %p56
      %p58 = scmp.ne.s32.totalorder %s46, %s47
      %p59 = scmp.eq.s32.totalorder %s21, 1
      %p60 = por %p58, %p59
      %p62 = scmp.ne.s32.totalorder %s47, %s61
      %p63 = scmp.eq.s32.totalorder %s21, 0
      %p64 = por %p62, %p63
      %s66 = sadd.s32 %s65, 1
      %p69 = scmp.eq.s32.totalorder %s15, 1
      %p70 = scmp.ne.s32.totalorder %s65, %s67
      %p71 = scmp.eq.s32.totalorder %s15, 0
      %p72 = por %p70, %p71
      %p73 = scmp.ne.s32.totalorder %s65, %s67
      %p74 = scmp.eq.s32.totalorder %s20, 1
      %p75 = por %p73, %p74
      %p76 = scmp.ne.s32.totalorder %s67, %s68
      %p77 = scmp.eq.s32.totalorder %s20, 0
      %p78 = por %p76, %p77
      %p79 = scmp.ne.s32.totalorder %s67, %s68
      %p80 = scmp.eq.s32.totalorder %s21, 1
      %p81 = por %p79, %p80
      %p83 = scmp.ne.s32.totalorder %s68, %s82
      %p84 = scmp.eq.s32.totalorder %s21, 0
      %p85 = por %p83, %p84
      %s87 = sadd.s32 %s86, 1
      %p90 = scmp.eq.s32.totalorder %s15, 1
      %p91 = scmp.ne.s32.totalorder %s86, %s88
      %p92 = scmp.eq.s32.totalorder %s15, 0
      %p93 = por %p91, %p92
      %p94 = scmp.ne.s32.totalorder %s86, %s88
      %p95 = scmp.eq.s32.totalorder %s20, 1
      %p96 = por %p94, %p95
      %p97 = scmp.ne.s32.totalorder %s88, %s89
      %p98 = scmp.eq.s32.totalorder %s20, 0
      %p99 = por %p97, %p98
      %p100 = scmp.ne.s32.totalorder %s88, %s89
      %p101 = scmp.eq.s32.totalorder %s21, 1
      %p102 = por %p100, %p101
      %p104 = scmp.ne.s32.totalorder %s89, %s103
      %p105 = scmp.eq.s32.totalorder %s21, 0
      %p106 = por %p104, %p105
      %s107 = ssub.s32 %s15, %s22
      %p108 = scmp.eq.s32.totalorder %s107, 0
      %s110 = sadd.s32 %s109, 1
      %s111 = scalar_select %p108, %s109, %s110
      %p114 = pneg %p108
      %p115 = scmp.eq.s32.totalorder %s15, 1
      %p116 = por %p114, %p115
      %p117 = scmp.ne.s32.totalorder %s109, %s112
      %p118 = scmp.eq.s32.totalorder %s15, 0
      %p119 = por %p117, %p118
      %p120 = scmp.ne.s32.totalorder %s109, %s112
      %p121 = scmp.eq.s32.totalorder %s20, 1
      %p122 = por %p120, %p121
      %p123 = scmp.ne.s32.totalorder %s112, %s113
      %p124 = scmp.eq.s32.totalorder %s20, 0
      %p125 = por %p123, %p124
      %p126 = scmp.ne.s32.totalorder %s112, %s113
      %p127 = scmp.eq.s32.totalorder %s21, 1
      %p128 = por %p126, %p127
      %p130 = scmp.ne.s32.totalorder %s113, %s129
      %p131 = scmp.eq.s32.totalorder %s21, 0
      %p132 = por %p130, %p131
      %s133 = ssub.s32 %s15, %s22
      %p134 = scmp.eq.s32.totalorder %s133, 0
      %s136 = sadd.s32 %s135, 1
      %s137 = scalar_select %p134, %s135, %s136
      %p140 = pneg %p134
      %p141 = scmp.eq.s32.totalorder %s15, 1
      %p142 = por %p140, %p141
      %p143 = scmp.ne.s32.totalorder %s135, %s138
      %p144 = scmp.eq.s32.totalorder %s15, 0
      %p145 = por %p143, %p144
      %p146 = scmp.ne.s32.totalorder %s135, %s138
      %p147 = scmp.eq.s32.totalorder %s20, 1
      %p148 = por %p146, %p147
      %p149 = scmp.ne.s32.totalorder %s138, %s139
      %p150 = scmp.eq.s32.totalorder %s20, 0
      %p151 = por %p149, %p150
      %p152 = scmp.ne.s32.totalorder %s138, %s139
      %p153 = scmp.eq.s32.totalorder %s21, 1
      %p154 = por %p152, %p153
      %p156 = scmp.ne.s32.totalorder %s139, %s155
      %p157 = scmp.eq.s32.totalorder %s21, 0
      %p158 = por %p156, %p157
      %p159 = scmp.le.s32.totalorder 1, %s15
      %p160 = scmp.lt.s32.totalorder %s15, 3
      %p161 = pnand %p159, %p160
      %p162 = pneg %p161
      // Predicated region
      $region9: #{tpu_custom_call.1} parent=5 // pred_check
        _
      $region10: #{tpu_custom_call.1} parent=5 // pred_check_branch
        %164 = sbr.rel (%p161) target = $region12
      $region11: #{tpu_custom_call.1} parent=5 // pred_region
        %s165 = ssub.s32 %s15, 1
        // Predicated region
        $region13: #{tpu_custom_call.1} parent=11 // pred_check
          %p166 = pneg %p36
        $region14: #{tpu_custom_call.1} parent=11 // pred_check_branch
          %168 = sbr.rel (%p166) target = $region16
        $region15: #{tpu_custom_call.1} parent=11 // pred_region
          %s170 = ssub.s32 16, 16
          %171 = vsyncadd [#allocation5], %s170
          %s173 = sshll.u32 %s0, 4
          %s174 = int_to_ptr.vmem [resolvable:$true] %s173
          %176 = dma.vmem_to_smem %s174, 16, [#allocation3], [#allocation5]
        $region16: #{tpu_custom_call.1} parent=11 // pred_fallthru
          _
        // Predicated region
        $region17: #{tpu_custom_call.1} parent=11 // pred_check
          %p177 = pneg %p57
        $region18: #{tpu_custom_call.1} parent=11 // pred_check_branch
          %179 = sbr.rel (%p177) target = $region20
        $region19: #{tpu_custom_call.1} parent=11 // pred_region
          _
        $region20: #{tpu_custom_call.1} parent=11 // pred_fallthru
          _
        // Predicated region
        $region21: #{tpu_custom_call.1} parent=11 // pred_check
          %p180 = pneg %p78
        $region22: #{tpu_custom_call.1} parent=11 // pred_check_branch
          %182 = sbr.rel (%p180) target = $region24
        $region23: #{tpu_custom_call.1} parent=11 // pred_region
          _
        $region24: #{tpu_custom_call.1} parent=11 // pred_fallthru
          _
        // Predicated region
        $region25: #{tpu_custom_call.1} parent=11 // pred_check
          %p183 = pneg %p99
        $region26: #{tpu_custom_call.1} parent=11 // pred_check_branch
          %185 = sbr.rel (%p183) target = $region28
        $region27: #{tpu_custom_call.1} parent=11 // pred_region
          _
        $region28: #{tpu_custom_call.1} parent=11 // pred_fallthru
          _
      $region12: #{tpu_custom_call.1} parent=5 // pred_fallthru
        _
      %p186 = scmp.lt.s32.totalorder %s15, 2
      // Predicated region
      $region29: #{tpu_custom_call.1} parent=5 // pred_check
        %p187 = pneg %p186
      $region30: #{tpu_custom_call.1} parent=5 // pred_check_branch
        %189 = sbr.rel (%p187) target = $region32
      $region31: #{tpu_custom_call.1} parent=5 // pred_region
        // Predicated region
        $region33: #{tpu_custom_call.1} parent=31 // pred_check
          %p190 = pneg %p119
        $region34: #{tpu_custom_call.1} parent=31 // pred_check_branch
          %192 = sbr.rel (%p190) target = $region36
        $region35: #{tpu_custom_call.1} parent=31 // pred_region
          %p193 = scmp.lt.s32.totalorder %s15, 1
          %s194 = scalar_select %p193, %s15, 1
          %s195 = smul.addr %s194, 2
          %s196 = smul.addr %s195, 4
          %s197 = scalar_lea.vmem %s4, %s196
        $region36: #{tpu_custom_call.1} parent=31 // pred_fallthru
          _
      $region32: #{tpu_custom_call.1} parent=5 // pred_fallthru
        _
      %p198 = scmp.le.s32.totalorder 1, %s15
      %p199 = scmp.lt.s32.totalorder %s15, 3
      %p200 = pnand %p198, %p199
      %p201 = pneg %p200
      // Predicated region
      $region37: #{tpu_custom_call.1} parent=5 // pred_check
        _
      $region38: #{tpu_custom_call.1} parent=5 // pred_check_branch
        %203 = sbr.rel (%p200) target = $region40
      $region39: #{tpu_custom_call.1} parent=5 // pred_region
        %s204 = ssub.s32 %s15, 1
        // Predicated region
        $region41: #{tpu_custom_call.1} parent=39 // pred_check
          %p205 = pneg %p36
        $region42: #{tpu_custom_call.1} parent=39 // pred_check_branch
          %207 = sbr.rel (%p205) target = $region44
        $region43: #{tpu_custom_call.1} parent=39 // pred_region
          %208 = dma.done [#allocation5], 16
        $region44: #{tpu_custom_call.1} parent=39 // pred_fallthru
          _
        %209 = sfence
        %p210 = pneg %p36
        %p211 = pneg %p33
        %p212 = pneg %p57
        %p213 = pneg %p54
        %p214 = pneg %p78
        %p215 = pneg %p75
        %p216 = pneg %p99
        %p217 = pneg %p96
        %p218 = scmp.lt.s32.totalorder %s20, 1
        %s219 = scalar_select %p218, %s20, 1
        %s220 = smul.addr %s219, 2
        %s221 = smul.addr %s220, 4
        %s222 = scalar_lea.vmem %s4, %s221
        %p223 = pneg %p125
        %p224 = pneg %p122
        %p225 = pneg %p151
        %p226 = pneg %p148
        %s227 = sand.u32 %s138, 1
        %s228 = scalar_lea.sflag [#allocation4], %s227
        %s229 = sand.u32 %s138, 1
        %s230 = smul.addr %s229, 8
        %s231 = scalar_lea.vmem [#allocation6], %s230
        %p232 = scmp.lt.s32.totalorder %s20, 1
        %s233 = scalar_select %p232, %s20, 1
        %s234 = smul.addr %s233, 2
        %s235 = smul.addr %s234, 4
        %s236 = scalar_lea.vmem %s4, %s235
        %v237 = vld [vmem:[%s1] sm:$0xff]
        %v238 = vld [vmem:[%s1 + $0x8] sm:$0xff]
        %v239 = vld [vmem:[%s1 + $0x10] sm:$0xff]
        %v240 = vld [vmem:[%s236] sm:$0xff]
        %v242 = vcombine.high %v240, %v240
        %vm243 = vcmask 31744
        %v245 = vsel %vm243, %v237, 0
        %v248 = vsel %vm243, %v238, 0
        %v251 = vsel %vm243, %v239, 0
        %vm253 = vcmask 1043456
        %v254 = vsel %vm253, %v240, 0
        %v256 = vsel %vm253, %v242, 0
        %258 = vmatprep.subr.mxu0 %v256
        %259 = vmatpush1.msra.mxu0 %v254
        %260 = vmatprep.subr.mxu0 0.0
        %261 = vmatpush1.msra.mxu0 0.0
        %262 = vmatprep.subr.mxu0 0.0
        %263 = vmatpush1.msra.mxu0 0.0
        %264 = vmatprep.subr.mxu0 0.0
        %265 = vmatpush1.msra.mxu0 0.0
        %266 = vmatprep.subr.mxu0 0.0
        %267 = vmatpush1.msra.mxu0 0.0
        %268 = vmatprep.subr.mxu0 0.0
        %269 = vmatpush1.msra.mxu0 0.0
        %270 = vmatprep.subr.mxu0 0.0
        %271 = vmatpush1.msra.mxu0 0.0
        %272 = vmatprep.subr.mxu0 0.0
        %273 = vmatpush1.msra.mxu0 0.0
        %274 = vmatprep.subr.mxu0 0.0
        %275 = vmatpush1.msra.mxu0 0.0
        %276 = vmatprep.subr.mxu0 0.0
        %277 = vmatpush1.msra.mxu0 0.0
        %278 = vmatprep.subr.mxu0 0.0
        %279 = vmatpush1.msra.mxu0 0.0
        %280 = vmatprep.subr.mxu0 0.0
        %281 = vmatpush1.msra.mxu0 0.0
        %282 = vmatprep.subr.mxu0 0.0
        %283 = vmatpush1.msra.mxu0 0.0
        %284 = vmatprep.subr.mxu0 0.0
        %285 = vmatpush1.msra.mxu0 0.0
        %286 = vmatprep.subr.mxu0 0.0
        %287 = vmatpush1.msra.mxu0 0.0
        %288 = vmatprep.subr.mxu0 0.0
        %289 = vmatpush1.msra.mxu0 0.0
        %290 = vmatprep.subr.mxu0 0.0
        %291 = vmatpush1.msra.mxu0 0.0
        %292 = vmatprep.subr.mxu0 0.0
        %293 = vmatpush1.msra.mxu0 0.0
        %294 = vmatprep.subr.mxu0 0.0
        %295 = vmatpush1.msra.mxu0 0.0
        %296 = vmatprep.subr.mxu0 0.0
        %297 = vmatpush1.msra.mxu0 0.0
        %298 = vmatprep.subr.mxu0 0.0
        %299 = vmatpush1.msra.mxu0 0.0
        %300 = vmatprep.subr.mxu0 0.0
        %301 = vmatpush1.msra.mxu0 0.0
        %302 = vmatprep.subr.mxu0 0.0
        %303 = vmatpush1.msra.mxu0 0.0
        %304 = vmatprep.subr.mxu0 0.0
        %305 = vmatpush1.msra.mxu0 0.0
        %306 = vmatprep.subr.mxu0 0.0
        %307 = vmatpush1.msra.mxu0 0.0
        %308 = vmatprep.subr.mxu0 0.0
        %309 = vmatpush1.msra.mxu0 0.0
        %310 = vmatprep.subr.mxu0 0.0
        %311 = vmatpush1.msra.mxu0 0.0
        %312 = vmatprep.subr.mxu0 0.0
        %313 = vmatpush1.msra.mxu0 0.0
        %314 = vmatprep.subr.mxu0 0.0
        %315 = vmatpush1.msra.mxu0 0.0
        %316 = vmatprep.subr.mxu0 0.0
        %317 = vmatpush1.msra.mxu0 0.0
        %318 = vmatprep.subr.mxu0 0.0
        %319 = vmatpush1.msra.mxu0 0.0
        %320 = vmatprep.subr.mxu0 0.0
        %321 = vmatpush1.msra.mxu0 0.0
        %322 = vmatprep.mubr.f32.mxu0 0.0
        %323 = vmatmul.mubr.f32.gmra.mrb[0].mxu0 %v245
        %v324 = vpop.f32.mrb[0].mxu0
        %v325 = vadd.f32 0.0, %v324
        %v326 = vpop.f32.mrb[0].mxu0
        %v327 = vadd.f32 0.0, %v326
        %328 = vmatprep.mubr.f32.mxu0 0.0
        %329 = vmatmul.mubr.f32.gmra.mrb[0].mxu0 %v248
        %v330 = vpop.f32.mrb[0].mxu0
        %v331 = vadd.f32 0.0, %v330
        %v332 = vpop.f32.mrb[0].mxu0
        %v333 = vadd.f32 0.0, %v332
        %334 = vmatprep.mubr.f32.mxu0 0.0
        %335 = vmatmul.mubr.f32.gmra.mrb[0].mxu0 %v251
        %v336 = vpop.f32.mrb[0].mxu0
        %v337 = vadd.f32 0.0, %v336
        %v338 = vpop.f32.mrb[0].mxu0
        %v339 = vadd.f32 0.0, %v338
        %340 = vdwg.mxu0
        %341 = vst [vmem:[#allocation2] sm:$0xff] %v325
        %342 = vst [vmem:[#allocation2 + $0x8] sm:$0xff] %v327
        %343 = vst [vmem:[#allocation2 + $0x10] sm:$0xff] %v331
        %344 = vst [vmem:[#allocation2 + $0x18] sm:$0xff] %v333
        %345 = vst [vmem:[#allocation2 + $0x20] sm:$0xff] %v337
        %346 = vst [vmem:[#allocation2 + $0x28] sm:$0xff] %v339
        %v347 = vld [vmem:[%s236] sm:$0xff]
        %v349 = vcombine.high %v347, %v347
        %v351 = vsel %vm253, %v347, -inf
        %v352 = vrot.slane %v351, 4
        %v353 = vmax.f32 %v351, %v352
        %v354 = vrot.slane %v353, 2
        %v355 = vmax.f32 %v353, %v354
        %v356 = vrot.slane %v355, 1
        %v357 = vmax.f32 %v355, %v356
        %v358 = vsel %vm253, %v349, -inf
        %v359 = vrot.slane %v358, 4
        %v360 = vmax.f32 %v358, %v359
        %v361 = vrot.slane %v360, 2
        %v362 = vmax.f32 %v360, %v361
        %v363 = vrot.slane %v362, 1
        %v364 = vmax.f32 %v362, %v363
        %s365 = scalar_lea.vmem [#allocation2], 34
        %v366 = vld [vmem:[%s365] ss:$8 sm:$0x3]
        %v367 = vld [vmem:[%s3] ss:$2 sm:$0x3]
        %s368 = scalar_lea.vmem %s3, 1
        %v369 = vld [vmem:[%s368] ss:$2 sm:$0x3]
        %s370 = scalar_lea.vmem [#allocation2], 4
        %v371 = vld [vmem:[%s370] ss:$8 sm:$0x3]
        %s372 = scalar_lea.vmem [#allocation2], 21
        %v373 = vld [vmem:[%s372] ss:$8 sm:$0x3]
        %v374 = vld [vmem:[#allocation2] ss:$8 sm:$0x3]
        %v376 = vlaneseq
        %v377 = vshrl.u32 %v376, 7
        %v378 = vsub.s32 1, %v377
        %v379 = vrot.slane %v374, %v378
        %380 = vrot.lane.b32.xlu0 %v379, 17
        %v381 = vpop.permute.xlu0 %380
        %v383 = vlaneseq
        %v384 = vshrl.u32 %v383, 7
        %v385 = vsub.s32 0, %v384
        %v386 = vrot.slane %v374, %v385
        %387 = vrot.lane.b32.xlu0 %v386, 17
        %v388 = vpop.permute.xlu0 %387
        %vm389 = vcmask 138240
        %v390 = vsel %vm389, %v388, %v381
        %v392 = vsel %vm389, %v381, %v388
        %vm393 = vcmp.ge.s32.totalorder %v367, 1
        %vm394 = vcmp.ge.s32.totalorder %v369, 1
        %vm395 = vmand %vm393, %vm394
        %v397 = vcombine.low %v392, %v390
        %v399 = vunpack.c.l.s4 1966171168
        %v400 = vunpack.c.0.s8 %v399
        %v401 = vlaneseq
        %v402 = vshrl.u32 %v401, 7
        %v403 = vsub.s32 %v400, %v402
        %v404 = vrot.slane %v397, %v403
        %v406 = vunpack.c.l.s4 1966171168
        %v407 = vunpack.c.0.s8 %v406
        %v408 = vlaneseq
        %v409 = vshrl.u32 %v408, 7
        %v410 = vsub.s32 %v407, %v409
        %v411 = vrot.slane %v404, %v410
        %v413 = vsel %vm395, %v411, 0.0
        %v414 = vadd.f32 %v371, %v413
        %s415 = scalar_lea.vmem [#allocation2], 17
        %v416 = vld [vmem:[%s415] ss:$8 sm:$0x3]
        %v418 = vlaneseq
        %v419 = vshrl.u32 %v418, 7
        %v420 = vsub.s32 1, %v419
        %v421 = vrot.slane %v416, %v420
        %422 = vrot.lane.b32.xlu0 %v421, 34
        %v423 = vpop.permute.xlu0 %422
        %v425 = vlaneseq
        %v426 = vshrl.u32 %v425, 7
        %v427 = vsub.s32 0, %v426
        %v428 = vrot.slane %v416, %v427
        %429 = vrot.lane.b32.xlu0 %v428, 34
        %v430 = vpop.permute.xlu0 %429
        %vm431 = vcmask 277504
        %v432 = vsel %vm431, %v430, %v423
        %v434 = vsel %vm431, %v423, %v430
        %vm435 = vcmp.ge.s32.totalorder %v367, 2
        %vm436 = vcmp.ge.s32.totalorder %v369, 2
        %vm437 = vmand %vm435, %vm436
        %v439 = vcombine.low %v434, %v432
        %v441 = vunpack.c.l.s4 1966171168
        %v442 = vunpack.c.0.s8 %v441
        %v443 = vlaneseq
        %v444 = vshrl.u32 %v443, 7
        %v445 = vsub.s32 %v442, %v444
        %v446 = vrot.slane %v439, %v445
        %v448 = vunpack.c.l.s4 1966171168
        %v449 = vunpack.c.0.s8 %v448
        %v450 = vlaneseq
        %v451 = vshrl.u32 %v450, 7
        %v452 = vsub.s32 %v449, %v451
        %v453 = vrot.slane %v446, %v452
        %v455 = vsel %vm437, %v453, 0.0
        %v456 = vadd.f32 %v373, %v455
        %s457 = scalar_lea.vmem [#allocation2], 1
        %v458 = vld [vmem:[%s457] ss:$8 sm:$0x3]
        %v460 = vlaneseq
        %v461 = vshrl.u32 %v460, 7
        %v462 = vsub.s32 1, %v461
        %v463 = vrot.slane %v458, %v462
        %464 = vrot.lane.b32.xlu0 %v463, 16
        %v465 = vpop.permute.xlu0 %464
        %v467 = vlaneseq
        %v468 = vshrl.u32 %v467, 7
        %v469 = vsub.s32 0, %v468
        %v470 = vrot.slane %v458, %v469
        %471 = vrot.lane.b32.xlu0 %v470, 16
        %v472 = vpop.permute.xlu0 %471
        %vm473 = vcmask 130048
        %v474 = vsel %vm473, %v472, %v465
        %v476 = vsel %vm473, %v465, %v472
        %v478 = vcombine.low %v476, %v474
        %v480 = vunpack.c.l.s4 1966171168
        %v481 = vunpack.c.0.s8 %v480
        %v482 = vlaneseq
        %v483 = vshrl.u32 %v482, 7
        %v484 = vsub.s32 %v481, %v483
        %v485 = vrot.slane %v478, %v484
        %v487 = vunpack.c.l.s4 1966171168
        %v488 = vunpack.c.0.s8 %v487
        %v489 = vlaneseq
        %v490 = vshrl.u32 %v489, 7
        %v491 = vsub.s32 %v488, %v490
        %v492 = vrot.slane %v485, %v491
        %v494 = vsel %vm393, %v492, 0.0
        %v495 = vadd.f32 %v414, %v494
        %s496 = scalar_lea.vmem [#allocation2], 18
        %v497 = vld [vmem:[%s496] ss:$8 sm:$0x3]
        %v499 = vlaneseq
        %v500 = vshrl.u32 %v499, 7
        %v501 = vsub.s32 1, %v500
        %v502 = vrot.slane %v497, %v501
        %503 = vrot.lane.b32.xlu0 %v502, 32
        %v504 = vpop.permute.xlu0 %503
        %v506 = vlaneseq
        %v507 = vshrl.u32 %v506, 7
        %v508 = vsub.s32 0, %v507
        %v509 = vrot.slane %v497, %v508
        %510 = vrot.lane.b32.xlu0 %v509, 32
        %v511 = vpop.permute.xlu0 %510
        %vm512 = vcmask 261120
        %v513 = vsel %vm512, %v511, %v504
        %v515 = vsel %vm512, %v504, %v511
        %v517 = vcombine.low %v515, %v513
        %v519 = vunpack.c.l.s4 1966171168
        %v520 = vunpack.c.0.s8 %v519
        %v521 = vlaneseq
        %v522 = vshrl.u32 %v521, 7
        %v523 = vsub.s32 %v520, %v522
        %v524 = vrot.slane %v517, %v523
        %v526 = vunpack.c.l.s4 1966171168
        %v527 = vunpack.c.0.s8 %v526
        %v528 = vlaneseq
        %v529 = vshrl.u32 %v528, 7
        %v530 = vsub.s32 %v527, %v529
        %v531 = vrot.slane %v524, %v530
        %v533 = vsel %vm435, %v531, 0.0
        %v534 = vadd.f32 %v456, %v533
        %s535 = scalar_lea.vmem [#allocation2], 2
        %v536 = vld [vmem:[%s535] ss:$8 sm:$0x3]
        %v538 = vlaneseq
        %v539 = vshrl.u32 %v538, 7
        %v540 = vsub.s32 1, %v539
        %v541 = vrot.slane %v536, %v540
        %542 = vrot.lane.b32.xlu0 %v541, 15
        %v543 = vpop.permute.xlu0 %542
        %v545 = vlaneseq
        %v546 = vshrl.u32 %v545, 7
        %v547 = vsub.s32 0, %v546
        %v548 = vrot.slane %v536, %v547
        %549 = vrot.lane.b32.xlu0 %v548, 15
        %v550 = vpop.permute.xlu0 %549
        %vm551 = vcmask 121856
        %v552 = vsel %vm551, %v550, %v543
        %v554 = vsel %vm551, %v543, %v550
        %vm555 = vcmp.lt.s32.totalorder %v369, 15
        %vm556 = vmand %vm393, %vm555
        %v558 = vcombine.low %v554, %v552
        %v560 = vunpack.c.l.s4 1966171168
        %v561 = vunpack.c.0.s8 %v560
        %v562 = vlaneseq
        %v563 = vshrl.u32 %v562, 7
        %v564 = vsub.s32 %v561, %v563
        %v565 = vrot.slane %v558, %v564
        %v567 = vunpack.c.l.s4 1966171168
        %v568 = vunpack.c.0.s8 %v567
        %v569 = vlaneseq
        %v570 = vshrl.u32 %v569, 7
        %v571 = vsub.s32 %v568, %v570
        %v572 = vrot.slane %v565, %v571
        %v574 = vsel %vm556, %v572, 0.0
        %v575 = vadd.f32 %v495, %v574
        %s576 = scalar_lea.vmem [#allocation2], 19
        %v577 = vld [vmem:[%s576] ss:$8 sm:$0x3]
        %v579 = vlaneseq
        %v580 = vshrl.u32 %v579, 7
        %v581 = vsub.s32 1, %v580
        %v582 = vrot.slane %v577, %v581
        %583 = vrot.lane.b32.xlu0 %v582, 30
        %v584 = vpop.permute.xlu0 %583
        %v586 = vlaneseq
        %v587 = vshrl.u32 %v586, 7
        %v588 = vsub.s32 0, %v587
        %v589 = vrot.slane %v577, %v588
        %590 = vrot.lane.b32.xlu0 %v589, 30
        %v591 = vpop.permute.xlu0 %590
        %vm592 = vcmask 244736
        %v593 = vsel %vm592, %v591, %v584
        %v595 = vsel %vm592, %v584, %v591
        %vm596 = vcmp.lt.s32.totalorder %v369, 14
        %vm597 = vmand %vm435, %vm596
        %v599 = vcombine.low %v595, %v593
        %v601 = vunpack.c.l.s4 1966171168
        %v602 = vunpack.c.0.s8 %v601
        %v603 = vlaneseq
        %v604 = vshrl.u32 %v603, 7
        %v605 = vsub.s32 %v602, %v604
        %v606 = vrot.slane %v599, %v605
        %v608 = vunpack.c.l.s4 1966171168
        %v609 = vunpack.c.0.s8 %v608
        %v610 = vlaneseq
        %v611 = vshrl.u32 %v610, 7
        %v612 = vsub.s32 %v609, %v611
        %v613 = vrot.slane %v606, %v612
        %v615 = vsel %vm597, %v613, 0.0
        %v616 = vadd.f32 %v534, %v615
        %s617 = scalar_lea.vmem [#allocation2], 3
        %v618 = vld [vmem:[%s617] ss:$8 sm:$0x3]
        %v620 = vlaneseq
        %v621 = vshrl.u32 %v620, 7
        %v622 = vsub.s32 1, %v621
        %v623 = vrot.slane %v618, %v622
        %624 = vrot.lane.b32.xlu0 %v623, 1
        %v625 = vpop.permute.xlu0 %624
        %v627 = vlaneseq
        %v628 = vshrl.u32 %v627, 7
        %v629 = vsub.s32 0, %v628
        %v630 = vrot.slane %v618, %v629
        %631 = vrot.lane.b32.xlu0 %v630, 1
        %v632 = vpop.permute.xlu0 %631
        %vm633 = vcmask 7168
        %v634 = vsel %vm633, %v632, %v625
        %v636 = vsel %vm633, %v625, %v632
        %v638 = vcombine.low %v636, %v634
        %v640 = vunpack.c.l.s4 1966171168
        %v641 = vunpack.c.0.s8 %v640
        %v642 = vlaneseq
        %v643 = vshrl.u32 %v642, 7
        %v644 = vsub.s32 %v641, %v643
        %v645 = vrot.slane %v638, %v644
        %v647 = vunpack.c.l.s4 1966171168
        %v648 = vunpack.c.0.s8 %v647
        %v649 = vlaneseq
        %v650 = vshrl.u32 %v649, 7
        %v651 = vsub.s32 %v648, %v650
        %v652 = vrot.slane %v645, %v651
        %v654 = vsel %vm394, %v652, 0.0
        %v655 = vadd.f32 %v575, %v654
        %s656 = scalar_lea.vmem [#allocation2], 20
        %v657 = vld [vmem:[%s656] ss:$8 sm:$0x3]
        %v659 = vlaneseq
        %v660 = vshrl.u32 %v659, 7
        %v661 = vsub.s32 1, %v660
        %v662 = vrot.slane %v657, %v661
        %663 = vrot.lane.b32.xlu0 %v662, 2
        %v664 = vpop.permute.xlu0 %663
        %v666 = vlaneseq
        %v667 = vshrl.u32 %v666, 7
        %v668 = vsub.s32 0, %v667
        %v669 = vrot.slane %v657, %v668
        %670 = vrot.lane.b32.xlu0 %v669, 2
        %v671 = vpop.permute.xlu0 %670
        %vm672 = vcmask 15360
        %v673 = vsel %vm672, %v671, %v664
        %v675 = vsel %vm672, %v664, %v671
        %v677 = vcombine.low %v675, %v673
        %v679 = vunpack.c.l.s4 1966171168
        %v680 = vunpack.c.0.s8 %v679
        %v681 = vlaneseq
        %v682 = vshrl.u32 %v681, 7
        %v683 = vsub.s32 %v680, %v682
        %v684 = vrot.slane %v677, %v683
        %v686 = vunpack.c.l.s4 1966171168
        %v687 = vunpack.c.0.s8 %v686
        %v688 = vlaneseq
        %v689 = vshrl.u32 %v688, 7
        %v690 = vsub.s32 %v687, %v689
        %v691 = vrot.slane %v684, %v690
        %v693 = vsel %vm436, %v691, 0.0
        %v694 = vadd.f32 %v616, %v693
        %s695 = scalar_lea.vmem [#allocation2], 5
        %v696 = vld [vmem:[%s695] ss:$8 sm:$0x3]
        %v698 = vlaneseq
        %v699 = vshrl.u32 %v698, 7
        %v700 = vsub.s32 0, %v699
        %v701 = vrot.slane %v696, %v700
        %v702 = vlaneseq
        %v703 = vshrl.u32 %v702, 7
        %v704 = vsub.s32 1, %v703
        %v705 = vrot.slane %v696, %v704
        %706 = vrot.lane.b32.xlu0 %v701, 127
        %v707 = vpop.permute.xlu0 %706
        %708 = vrot.lane.b32.xlu0 %v705, 127
        %v709 = vpop.permute.xlu0 %708
        %vm710 = vcmask 1039360
        %v711 = vsel %vm710, %v707, %v709
        %v714 = vsel %vm710, %v709, %v707
        %v716 = vcombine.low %v711, %v714
        %v718 = vunpack.c.l.s4 1966171168
        %v719 = vunpack.c.0.s8 %v718
        %v720 = vlaneseq
        %v721 = vshrl.u32 %v720, 7
        %v722 = vsub.s32 %v719, %v721
        %v723 = vrot.slane %v716, %v722
        %v725 = vunpack.c.l.s4 1966171168
        %v726 = vunpack.c.0.s8 %v725
        %v727 = vlaneseq
        %v728 = vshrl.u32 %v727, 7
        %v729 = vsub.s32 %v726, %v728
        %v730 = vrot.slane %v723, %v729
        %v732 = vsel %vm555, %v730, 0.0
        %v733 = vadd.f32 %v655, %v732
        %s734 = scalar_lea.vmem [#allocation2], 22
        %v735 = vld [vmem:[%s734] ss:$8 sm:$0x3]
        %v737 = vlaneseq
        %v738 = vshrl.u32 %v737, 7
        %v739 = vsub.s32 0, %v738
        %v740 = vrot.slane %v735, %v739
        %v741 = vlaneseq
        %v742 = vshrl.u32 %v741, 7
        %v743 = vsub.s32 1, %v742
        %v744 = vrot.slane %v735, %v743
        %745 = vrot.lane.b32.xlu0 %v740, 126
        %v746 = vpop.permute.xlu0 %745
        %747 = vrot.lane.b32.xlu0 %v744, 126
        %v748 = vpop.permute.xlu0 %747
        %vm749 = vcmask 1031168
        %v750 = vsel %vm749, %v746, %v748
        %v753 = vsel %vm749, %v748, %v746
        %v755 = vcombine.low %v750, %v753
        %v757 = vunpack.c.l.s4 1966171168
        %v758 = vunpack.c.0.s8 %v757
        %v759 = vlaneseq
        %v760 = vshrl.u32 %v759, 7
        %v761 = vsub.s32 %v758, %v760
        %v762 = vrot.slane %v755, %v761
        %v764 = vunpack.c.l.s4 1966171168
        %v765 = vunpack.c.0.s8 %v764
        %v766 = vlaneseq
        %v767 = vshrl.u32 %v766, 7
        %v768 = vsub.s32 %v765, %v767
        %v769 = vrot.slane %v762, %v768
        %v771 = vsel %vm596, %v769, 0.0
        %v772 = vadd.f32 %v694, %v771
        %s773 = scalar_lea.vmem [#allocation2], 6
        %v774 = vld [vmem:[%s773] ss:$8 sm:$0x3]
        %v776 = vlaneseq
        %v777 = vshrl.u32 %v776, 7
        %v778 = vsub.s32 0, %v777
        %v779 = vrot.slane %v774, %v778
        %v780 = vlaneseq
        %v781 = vshrl.u32 %v780, 7
        %v782 = vsub.s32 1, %v781
        %v783 = vrot.slane %v774, %v782
        %784 = vrot.lane.b32.xlu0 %v779, 113
        %v785 = vpop.permute.xlu0 %784
        %786 = vrot.lane.b32.xlu0 %v783, 113
        %v787 = vpop.permute.xlu0 %786
        %vm788 = vcmask 924672
        %v789 = vsel %vm788, %v785, %v787
        %v792 = vsel %vm788, %v787, %v785
        %vm793 = vcmp.lt.s32.totalorder %v367, 15
        %vm794 = vmand %vm793, %vm394
        %v796 = vcombine.low %v789, %v792
        %v798 = vunpack.c.l.s4 1966171168
        %v799 = vunpack.c.0.s8 %v798
        %v800 = vlaneseq
        %v801 = vshrl.u32 %v800, 7
        %v802 = vsub.s32 %v799, %v801
        %v803 = vrot.slane %v796, %v802
        %v805 = vunpack.c.l.s4 1966171168
        %v806 = vunpack.c.0.s8 %v805
        %v807 = vlaneseq
        %v808 = vshrl.u32 %v807, 7
        %v809 = vsub.s32 %v806, %v808
        %v810 = vrot.slane %v803, %v809
        %v812 = vsel %vm794, %v810, 0.0
        %v813 = vadd.f32 %v733, %v812
        %s814 = scalar_lea.vmem [#allocation2], 23
        %v815 = vld [vmem:[%s814] ss:$8 sm:$0x3]
        %v817 = vlaneseq
        %v818 = vshrl.u32 %v817, 7
        %v819 = vsub.s32 0, %v818
        %v820 = vrot.slane %v815, %v819
        %v821 = vlaneseq
        %v822 = vshrl.u32 %v821, 7
        %v823 = vsub.s32 1, %v822
        %v824 = vrot.slane %v815, %v823
        %825 = vrot.lane.b32.xlu0 %v820, 98
        %v826 = vpop.permute.xlu0 %825
        %827 = vrot.lane.b32.xlu0 %v824, 98
        %v828 = vpop.permute.xlu0 %827
        %vm829 = vcmask 801792
        %v830 = vsel %vm829, %v826, %v828
        %v833 = vsel %vm829, %v828, %v826
        %vm834 = vcmp.lt.s32.totalorder %v367, 14
        %vm835 = vmand %vm834, %vm436
        %v837 = vcombine.low %v830, %v833
        %v839 = vunpack.c.l.s4 1966171168
        %v840 = vunpack.c.0.s8 %v839
        %v841 = vlaneseq
        %v842 = vshrl.u32 %v841, 7
        %v843 = vsub.s32 %v840, %v842
        %v844 = vrot.slane %v837, %v843
        %v846 = vunpack.c.l.s4 1966171168
        %v847 = vunpack.c.0.s8 %v846
        %v848 = vlaneseq
        %v849 = vshrl.u32 %v848, 7
        %v850 = vsub.s32 %v847, %v849
        %v851 = vrot.slane %v844, %v850
        %v853 = vsel %vm835, %v851, 0.0
        %v854 = vadd.f32 %v772, %v853
        %s855 = scalar_lea.vmem [#allocation2], 7
        %v856 = vld [vmem:[%s855] ss:$8 sm:$0x3]
        %v858 = vlaneseq
        %v859 = vshrl.u32 %v858, 7
        %v860 = vsub.s32 0, %v859
        %v861 = vrot.slane %v856, %v860
        %v862 = vlaneseq
        %v863 = vshrl.u32 %v862, 7
        %v864 = vsub.s32 1, %v863
        %v865 = vrot.slane %v856, %v864
        %866 = vrot.lane.b32.xlu0 %v861, 112
        %v867 = vpop.permute.xlu0 %866
        %868 = vrot.lane.b32.xlu0 %v865, 112
        %v869 = vpop.permute.xlu0 %868
        %vm870 = vcmask 916480
        %v871 = vsel %vm870, %v867, %v869
        %v874 = vsel %vm870, %v869, %v867
        %v876 = vcombine.low %v871, %v874
        %v878 = vunpack.c.l.s4 1966171168
        %v879 = vunpack.c.0.s8 %v878
        %v880 = vlaneseq
        %v881 = vshrl.u32 %v880, 7
        %v882 = vsub.s32 %v879, %v881
        %v883 = vrot.slane %v876, %v882
        %v885 = vunpack.c.l.s4 1966171168
        %v886 = vunpack.c.0.s8 %v885
        %v887 = vlaneseq
        %v888 = vshrl.u32 %v887, 7
        %v889 = vsub.s32 %v886, %v888
        %v890 = vrot.slane %v883, %v889
        %v892 = vsel %vm793, %v890, 0.0
        %v893 = vadd.f32 %v813, %v892
        %s894 = scalar_lea.vmem [#allocation2], 32
        %v895 = vld [vmem:[%s894] ss:$8 sm:$0x3]
        %v897 = vlaneseq
        %v898 = vshrl.u32 %v897, 7
        %v899 = vsub.s32 0, %v898
        %v900 = vrot.slane %v895, %v899
        %v901 = vlaneseq
        %v902 = vshrl.u32 %v901, 7
        %v903 = vsub.s32 1, %v902
        %v904 = vrot.slane %v895, %v903
        %905 = vrot.lane.b32.xlu0 %v900, 96
        %v906 = vpop.permute.xlu0 %905
        %907 = vrot.lane.b32.xlu0 %v904, 96
        %v908 = vpop.permute.xlu0 %907
        %vm909 = vcmask 785408
        %v910 = vsel %vm909, %v906, %v908
        %v913 = vsel %vm909, %v908, %v906
        %v915 = vcombine.low %v910, %v913
        %v917 = vunpack.c.l.s4 1966171168
        %v918 = vunpack.c.0.s8 %v917
        %v919 = vlaneseq
        %v920 = vshrl.u32 %v919, 7
        %v921 = vsub.s32 %v918, %v920
        %v922 = vrot.slane %v915, %v921
        %v924 = vunpack.c.l.s4 1966171168
        %v925 = vunpack.c.0.s8 %v924
        %v926 = vlaneseq
        %v927 = vshrl.u32 %v926, 7
        %v928 = vsub.s32 %v925, %v927
        %v929 = vrot.slane %v922, %v928
        %v931 = vsel %vm834, %v929, 0.0
        %v932 = vadd.f32 %v854, %v931
        %s933 = scalar_lea.vmem [#allocation2], 16
        %v934 = vld [vmem:[%s933] ss:$8 sm:$0x3]
        %v936 = vlaneseq
        %v937 = vshrl.u32 %v936, 7
        %v938 = vsub.s32 0, %v937
        %v939 = vrot.slane %v934, %v938
        %v940 = vlaneseq
        %v941 = vshrl.u32 %v940, 7
        %v942 = vsub.s32 1, %v941
        %v943 = vrot.slane %v934, %v942
        %944 = vrot.lane.b32.xlu0 %v939, 111
        %v945 = vpop.permute.xlu0 %944
        %946 = vrot.lane.b32.xlu0 %v943, 111
        %v947 = vpop.permute.xlu0 %946
        %vm948 = vcmask 908288
        %v949 = vsel %vm948, %v945, %v947
        %v952 = vsel %vm948, %v947, %v945
        %vm953 = vmand %vm793, %vm555
        %v955 = vcombine.low %v949, %v952
        %v957 = vunpack.c.l.s4 1966171168
        %v958 = vunpack.c.0.s8 %v957
        %v959 = vlaneseq
        %v960 = vshrl.u32 %v959, 7
        %v961 = vsub.s32 %v958, %v960
        %v962 = vrot.slane %v955, %v961
        %v964 = vunpack.c.l.s4 1966171168
        %v965 = vunpack.c.0.s8 %v964
        %v966 = vlaneseq
        %v967 = vshrl.u32 %v966, 7
        %v968 = vsub.s32 %v965, %v967
        %v969 = vrot.slane %v962, %v968
        %v971 = vsel %vm953, %v969, 0.0
        %v972 = vadd.f32 %v893, %v971
        %s973 = scalar_lea.vmem [#allocation2], 33
        %v974 = vld [vmem:[%s973] ss:$8 sm:$0x3]
        %v976 = vlaneseq
        %v977 = vshrl.u32 %v976, 7
        %v978 = vsub.s32 0, %v977
        %v979 = vrot.slane %v974, %v978
        %v980 = vlaneseq
        %v981 = vshrl.u32 %v980, 7
        %v982 = vsub.s32 1, %v981
        %v983 = vrot.slane %v974, %v982
        %984 = vrot.lane.b32.xlu0 %v979, 94
        %v985 = vpop.permute.xlu0 %984
        %986 = vrot.lane.b32.xlu0 %v983, 94
        %v987 = vpop.permute.xlu0 %986
        %vm988 = vcmask 769024
        %v989 = vsel %vm988, %v985, %v987
        %v992 = vsel %vm988, %v987, %v985
        %vm993 = vmand %vm834, %vm596
        %v995 = vcombine.low %v989, %v992
        %v997 = vunpack.c.l.s4 1966171168
        %v998 = vunpack.c.0.s8 %v997
        %v999 = vlaneseq
        %v1000 = vshrl.u32 %v999, 7
        %v1001 = vsub.s32 %v998, %v1000
        %v1002 = vrot.slane %v995, %v1001
        %v1004 = vunpack.c.l.s4 1966171168
        %v1005 = vunpack.c.0.s8 %v1004
        %v1006 = vlaneseq
        %v1007 = vshrl.u32 %v1006, 7
        %v1008 = vsub.s32 %v1005, %v1007
        %v1009 = vrot.slane %v1002, %v1008
        %v1011 = vsel %vm993, %v1009, 0.0
        %v1012 = vadd.f32 %v932, %v1011
        %v1014 = vlaneseq
        %v1015 = vshrl.u32 %v1014, 7
        %v1016 = vsub.s32 0, %v1015
        %v1017 = vrot.slane %v972, %v1016
        %v1018 = vlaneseq
        %v1019 = vshrl.u32 %v1018, 7
        %v1020 = vsub.s32 1, %v1019
        %v1021 = vrot.slane %v972, %v1020
        %v1024 = vadd.f32 %v357, %v1017
        %v1025 = vadd.f32 %v364, %v1021
        %v1026 = vadd.f32 %v366, %v1012
        %v1028 = vlaneseq
        %v1029 = vshrl.u32 %v1028, 7
        %v1030 = vsub.s32 0, %v1029
        %v1031 = vrot.slane %v1026, %v1030
        %v1032 = vlaneseq
        %v1033 = vshrl.u32 %v1032, 7
        %v1034 = vsub.s32 1, %v1033
        %v1035 = vrot.slane %v1026, %v1034
        %vm1038 = vcmask 1040384
        %v1039 = vsel %vm1038, %v1024, %v1031
        %v1040 = vsel %vm1038, %v1025, %v1035
        %v1041 = vld [vmem:[%s2] sm:$0x3]
        %1043 = vset.pattern.permute.xlu0 4
        %1044 = vperm.xlu0 %1043, %v1041
        %v1045 = vpop.permute.xlu0 %1044
        %v1047 = vmul.f32 %v1039, %v1045
        %v1048 = vmul.f32 %v1040, %v1045
        %1050 = vrot.lane.b32.xlu0 %v1040, 17
        %v1051 = vpop.permute.xlu0 %1050
        %1054 = vrot.lane.b32.xlu0 %v1039, 17
        %v1055 = vpop.permute.xlu0 %1054
        %v1056 = vsel %vm389, %v1055, %v1051
        %v1059 = vsel %vm389, %v1051, %v1055
        %v1060 = vsel %vm395, 1, 0
        %v1061 = vlaneseq
        %v1062 = vshrl.u32 %v1061, 7
        %v1063 = vsub.s32 0, %v1062
        %v1064 = vrot.slane %v1060, %v1063
        %v1065 = vlaneseq
        %v1066 = vshrl.u32 %v1065, 7
        %v1067 = vsub.s32 1, %v1066
        %v1068 = vrot.slane %v1060, %v1067
        %vm1069 = vcmp.eq.s32.totalorder %v1064, 1
        %vm1070 = vcmp.eq.s32.totalorder %v1068, 1
        %v1071 = vsel %vm1069, %v1059, 0.0
        %v1072 = vsel %vm1070, %v1056, 0.0
        %1073 = vset.pattern.permute.xlu0 0
        %1074 = vperm.xlu0 %1073, %v1041
        %v1075 = vpop.permute.xlu0 %1074
        %v1077 = vmul.f32 %v1071, %v1075
        %v1078 = vmul.f32 %v1072, %v1075
        %v1079 = vadd.f32 %v1047, %v1077
        %v1080 = vadd.f32 %v1048, %v1078
        %1081 = vrot.lane.b32.xlu0 %v1040, 16
        %v1082 = vpop.permute.xlu0 %1081
        %1084 = vrot.lane.b32.xlu0 %v1039, 16
        %v1085 = vpop.permute.xlu0 %1084
        %v1086 = vsel %vm473, %v1085, %v1082
        %v1089 = vsel %vm473, %v1082, %v1085
        %v1090 = vsel %vm393, 1, 0
        %v1091 = vlaneseq
        %v1092 = vshrl.u32 %v1091, 7
        %v1093 = vsub.s32 0, %v1092
        %v1094 = vrot.slane %v1090, %v1093
        %v1095 = vlaneseq
        %v1096 = vshrl.u32 %v1095, 7
        %v1097 = vsub.s32 1, %v1096
        %v1098 = vrot.slane %v1090, %v1097
        %vm1099 = vcmp.eq.s32.totalorder %v1094, 1
        %vm1100 = vcmp.eq.s32.totalorder %v1098, 1
        %v1101 = vsel %vm1099, %v1089, 0.0
        %v1102 = vsel %vm1100, %v1086, 0.0
        %1103 = vset.pattern.permute.xlu0 1
        %1104 = vperm.xlu0 %1103, %v1041
        %v1105 = vpop.permute.xlu0 %1104
        %v1107 = vmul.f32 %v1101, %v1105
        %v1108 = vmul.f32 %v1102, %v1105
        %v1109 = vadd.f32 %v1079, %v1107
        %v1110 = vadd.f32 %v1080, %v1108
        %1111 = vrot.lane.b32.xlu0 %v1040, 15
        %v1112 = vpop.permute.xlu0 %1111
        %1114 = vrot.lane.b32.xlu0 %v1039, 15
        %v1115 = vpop.permute.xlu0 %1114
        %v1116 = vsel %vm551, %v1115, %v1112
        %v1119 = vsel %vm551, %v1112, %v1115
        %v1120 = vsel %vm556, 1, 0
        %v1121 = vlaneseq
        %v1122 = vshrl.u32 %v1121, 7
        %v1123 = vsub.s32 0, %v1122
        %v1124 = vrot.slane %v1120, %v1123
        %v1125 = vlaneseq
        %v1126 = vshrl.u32 %v1125, 7
        %v1127 = vsub.s32 1, %v1126
        %v1128 = vrot.slane %v1120, %v1127
        %vm1129 = vcmp.eq.s32.totalorder %v1124, 1
        %vm1130 = vcmp.eq.s32.totalorder %v1128, 1
        %v1131 = vsel %vm1129, %v1119, 0.0
        %v1132 = vsel %vm1130, %v1116, 0.0
        %1133 = vset.pattern.permute.xlu0 2
        %1134 = vperm.xlu0 %1133, %v1041
        %v1135 = vpop.permute.xlu0 %1134
        %v1137 = vmul.f32 %v1131, %v1135
        %v1138 = vmul.f32 %v1132, %v1135
        %v1139 = vadd.f32 %v1109, %v1137
        %v1140 = vadd.f32 %v1110, %v1138
        %1141 = vrot.lane.b32.xlu0 %v1040, 1
        %v1142 = vpop.permute.xlu0 %1141
        %1144 = vrot.lane.b32.xlu0 %v1039, 1
        %v1145 = vpop.permute.xlu0 %1144
        %v1146 = vsel %vm633, %v1145, %v1142
        %v1149 = vsel %vm633, %v1142, %v1145
        %v1150 = vsel %vm394, 1, 0
        %v1151 = vlaneseq
        %v1152 = vshrl.u32 %v1151, 7
        %v1153 = vsub.s32 0, %v1152
        %v1154 = vrot.slane %v1150, %v1153
        %v1155 = vlaneseq
        %v1156 = vshrl.u32 %v1155, 7
        %v1157 = vsub.s32 1, %v1156
        %v1158 = vrot.slane %v1150, %v1157
        %vm1159 = vcmp.eq.s32.totalorder %v1154, 1
        %vm1160 = vcmp.eq.s32.totalorder %v1158, 1
        %v1161 = vsel %vm1159, %v1149, 0.0
        %v1162 = vsel %vm1160, %v1146, 0.0
        %1163 = vset.pattern.permute.xlu0 3
        %1164 = vperm.xlu0 %1163, %v1041
        %v1165 = vpop.permute.xlu0 %1164
        %v1167 = vmul.f32 %v1161, %v1165
        %v1168 = vmul.f32 %v1162, %v1165
        %v1169 = vadd.f32 %v1139, %v1167
        %v1170 = vadd.f32 %v1140, %v1168
        %1171 = vrot.lane.b32.xlu0 %v1039, 127
        %v1172 = vpop.permute.xlu0 %1171
        %1173 = vrot.lane.b32.xlu0 %v1040, 127
        %v1174 = vpop.permute.xlu0 %1173
        %v1175 = vsel %vm710, %v1172, %v1174
        %v1179 = vsel %vm710, %v1174, %v1172
        %v1180 = vsel %vm555, 1, 0
        %v1181 = vlaneseq
        %v1182 = vshrl.u32 %v1181, 7
        %v1183 = vsub.s32 0, %v1182
        %v1184 = vrot.slane %v1180, %v1183
        %v1185 = vlaneseq
        %v1186 = vshrl.u32 %v1185, 7
        %v1187 = vsub.s32 1, %v1186
        %v1188 = vrot.slane %v1180, %v1187
        %vm1189 = vcmp.eq.s32.totalorder %v1184, 1
        %vm1190 = vcmp.eq.s32.totalorder %v1188, 1
        %v1191 = vsel %vm1189, %v1175, 0.0
        %v1192 = vsel %vm1190, %v1179, 0.0
        %1193 = vset.pattern.permute.xlu0 5
        %1194 = vperm.xlu0 %1193, %v1041
        %v1195 = vpop.permute.xlu0 %1194
        %v1197 = vmul.f32 %v1191, %v1195
        %v1198 = vmul.f32 %v1192, %v1195
        %v1199 = vadd.f32 %v1169, %v1197
        %v1200 = vadd.f32 %v1170, %v1198
        %1201 = vrot.lane.b32.xlu0 %v1039, 113
        %v1202 = vpop.permute.xlu0 %1201
        %1203 = vrot.lane.b32.xlu0 %v1040, 113
        %v1204 = vpop.permute.xlu0 %1203
        %v1205 = vsel %vm788, %v1202, %v1204
        %v1209 = vsel %vm788, %v1204, %v1202
        %v1210 = vsel %vm794, 1, 0
        %v1211 = vlaneseq
        %v1212 = vshrl.u32 %v1211, 7
        %v1213 = vsub.s32 0, %v1212
        %v1214 = vrot.slane %v1210, %v1213
        %v1215 = vlaneseq
        %v1216 = vshrl.u32 %v1215, 7
        %v1217 = vsub.s32 1, %v1216
        %v1218 = vrot.slane %v1210, %v1217
        %vm1219 = vcmp.eq.s32.totalorder %v1214, 1
        %vm1220 = vcmp.eq.s32.totalorder %v1218, 1
        %v1221 = vsel %vm1219, %v1205, 0.0
        %v1222 = vsel %vm1220, %v1209, 0.0
        %1223 = vset.pattern.permute.xlu0 6
        %1224 = vperm.xlu0 %1223, %v1041
        %v1225 = vpop.permute.xlu0 %1224
        %v1227 = vmul.f32 %v1221, %v1225
        %v1228 = vmul.f32 %v1222, %v1225
        %v1229 = vadd.f32 %v1199, %v1227
        %v1230 = vadd.f32 %v1200, %v1228
        %1231 = vrot.lane.b32.xlu0 %v1039, 112
        %v1232 = vpop.permute.xlu0 %1231
        %1233 = vrot.lane.b32.xlu0 %v1040, 112
        %v1234 = vpop.permute.xlu0 %1233
        %v1235 = vsel %vm870, %v1232, %v1234
        %v1239 = vsel %vm870, %v1234, %v1232
        %v1240 = vsel %vm793, 1, 0
        %v1241 = vlaneseq
        %v1242 = vshrl.u32 %v1241, 7
        %v1243 = vsub.s32 0, %v1242
        %v1244 = vrot.slane %v1240, %v1243
        %v1245 = vlaneseq
        %v1246 = vshrl.u32 %v1245, 7
        %v1247 = vsub.s32 1, %v1246
        %v1248 = vrot.slane %v1240, %v1247
        %vm1249 = vcmp.eq.s32.totalorder %v1244, 1
        %vm1250 = vcmp.eq.s32.totalorder %v1248, 1
        %v1251 = vsel %vm1249, %v1235, 0.0
        %v1252 = vsel %vm1250, %v1239, 0.0
        %1253 = vset.pattern.permute.xlu0 7
        %1254 = vperm.xlu0 %1253, %v1041
        %v1255 = vpop.permute.xlu0 %1254
        %v1257 = vmul.f32 %v1251, %v1255
        %v1258 = vmul.f32 %v1252, %v1255
        %v1259 = vadd.f32 %v1229, %v1257
        %v1260 = vadd.f32 %v1230, %v1258
        %1261 = vrot.lane.b32.xlu0 %v1039, 111
        %v1262 = vpop.permute.xlu0 %1261
        %1263 = vrot.lane.b32.xlu0 %v1040, 111
        %v1264 = vpop.permute.xlu0 %1263
        %v1265 = vsel %vm948, %v1262, %v1264
        %v1269 = vsel %vm948, %v1264, %v1262
        %v1270 = vsel %vm953, 1, 0
        %v1271 = vlaneseq
        %v1272 = vshrl.u32 %v1271, 7
        %v1273 = vsub.s32 0, %v1272
        %v1274 = vrot.slane %v1270, %v1273
        %v1275 = vlaneseq
        %v1276 = vshrl.u32 %v1275, 7
        %v1277 = vsub.s32 1, %v1276
        %v1278 = vrot.slane %v1270, %v1277
        %vm1279 = vcmp.eq.s32.totalorder %v1274, 1
        %vm1280 = vcmp.eq.s32.totalorder %v1278, 1
        %v1281 = vsel %vm1279, %v1265, 0.0
        %v1282 = vsel %vm1280, %v1269, 0.0
        %1283 = vset.pattern.permute.xlu0 8
        %1284 = vperm.xlu0 %1283, %v1041
        %v1285 = vpop.permute.xlu0 %1284
        %v1287 = vmul.f32 %v1281, %v1285
        %v1288 = vmul.f32 %v1282, %v1285
        %v1289 = vadd.f32 %v1259, %v1287
        %v1290 = vadd.f32 %v1260, %v1288
        %vm1291 = vcmask 1041408
        %v1292 = vsel %vm1291, %v1289, 0.0
        %v1293 = vrot.slane %v1292, 4
        %v1294 = vadd.f32 %v1292, %v1293
        %v1295 = vrot.slane %v1294, 2
        %v1296 = vadd.f32 %v1294, %v1295
        %v1297 = vrot.slane %v1296, 1
        %v1298 = vadd.f32 %v1296, %v1297
        %v1299 = vsel %vm1291, %v1290, 0.0
        %v1300 = vrot.slane %v1299, 4
        %v1301 = vadd.f32 %v1299, %v1300
        %v1302 = vrot.slane %v1301, 2
        %v1303 = vadd.f32 %v1301, %v1302
        %v1304 = vrot.slane %v1303, 1
        %v1305 = vadd.f32 %v1303, %v1304
        %s1306 = sld [smem:[#allocation3]]
        %v1307 = vstv %s1306
        %v1308 = vmul.f32 %v1298, %v1307
        %v1309 = vmul.f32 %v1305, %v1307
        %s1310 = sld [smem:[#allocation3 + $0x1]]
        %v1311 = vstv %s1310
        %v1312 = vadd.f32 %v1308, %v1311
        %v1313 = vadd.f32 %v1309, %v1311
        %vm1314 = vcmp.gt.f32.partialorder %v1312, 0.0
        %vm1315 = vcmp.gt.f32.partialorder %v1313, 0.0
        %v1316 = vmul.f32 %v1312, 1.442695
        %v1317 = vpow.pop %v1316
        %v1318 = vmul.f32 %v1313, 1.442695
        %v1319 = vpow.pop %v1318
        %v1320 = vsub.f32 %v1317, 1.0
        %v1321 = vsub.f32 %v1319, 1.0
        %v1322 = vmul.f32 %v1320, 1.6732632
        %v1323 = vmul.f32 %v1321, 1.6732632
        %v1324 = vsel %vm1314, %v1312, %v1322
        %v1325 = vsel %vm1315, %v1313, %v1323
        %v1326 = vmul.f32 %v1324, 1.050701
        %v1327 = vmul.f32 %v1325, 1.050701
        %v1328 = vsub.f32 0.0, %v1326
        %v1329 = vsub.f32 0.0, %v1327
        %v1330 = vmul.f32 %v1328, 1.442695
        %v1331 = vpow.pop %v1330
        %v1332 = vmul.f32 %v1329, 1.442695
        %v1333 = vpow.pop %v1332
        %v1334 = vadd.f32 %v1331, 1.0
        %v1335 = vadd.f32 %v1333, 1.0
        %v1336 = vrcp.pop %v1334
        %v1337 = vrcp.pop %v1335
        %v1340 = vcombine.low %v1336, %v1337
        %v1342 = vmul.f32 %v347, %v1340
        %1343 = vst [vmem:[%s231] sm:$0xff] %v1342
        %s1344 = sand.u32 %s138, 1
        %s1345 = scalar_lea.sflag [#allocation4], %s1344
        %s1346 = sand.u32 %s138, 1
        %s1347 = smul.addr %s1346, 8
        %s1348 = scalar_lea.vmem [#allocation6], %s1347
        // Predicated region
        $region45: #{tpu_custom_call.1} parent=39 // pred_check
          %p1349 = pneg %p148
        $region46: #{tpu_custom_call.1} parent=39 // pred_check_branch
          %1351 = sbr.rel (%p1349) target = $region48
        $region47: #{tpu_custom_call.1} parent=39 // pred_region
          %s1353 = ssub.s32 128, 128
          %1354 = vsyncadd %s1345, %s1353
          %s1355 = smul.addr %s20, 2
          %s1356 = smul.addr %s1355, 64
          %s1357 = scalar_lea.hbm %s5, %s1356
          %s1359 = sshll.u32 %s1348, 4
          %s1360 = int_to_ptr.vmem [resolvable:$true] %s1359
          %1362 = dma.vmem_to_hbm [thread:$0]  %s1360, 128, %s1357, %s1345
        $region48: #{tpu_custom_call.1} parent=39 // pred_fallthru
          _
      $region40: #{tpu_custom_call.1} parent=5 // pred_fallthru
        _
      %p1363 = scmp.le.s32.totalorder 2, %s15
      // Predicated region
      $region49: #{tpu_custom_call.1} parent=5 // pred_check
        %p1364 = pneg %p1363
      $region50: #{tpu_custom_call.1} parent=5 // pred_check_branch
        %1366 = sbr.rel (%p1364) target = $region52
      $region51: #{tpu_custom_call.1} parent=5 // pred_region
        %s1367 = ssub.s32 %s15, 2
        // Predicated region
        $region53: #{tpu_custom_call.1} parent=51 // pred_check
          %p1368 = pneg %p154
        $region54: #{tpu_custom_call.1} parent=51 // pred_check_branch
          %1370 = sbr.rel (%p1368) target = $region56
        $region55: #{tpu_custom_call.1} parent=51 // pred_region
          %s1371 = sand.u32 %s139, 1
          %s1372 = scalar_lea.sflag [#allocation4], %s1371
          %s1373 = sand.u32 %s139, 1
          %s1374 = smul.addr %s1373, 8
          %s1375 = scalar_lea.vmem [#allocation6], %s1374
          %1376 = dma.done %s1372, 128
        $region56: #{tpu_custom_call.1} parent=51 // pred_fallthru
          _
      $region52: #{tpu_custom_call.1} parent=5 // pred_fallthru
        _
    $region6: #{tpu_custom_call.1} parent=1 // loop_footer
      %s19 = sadd.s32 1, %s15
    $region7: #{tpu_custom_call.1} parent=1 // loop_footer_branch
      %14 = sbr.rel target = $region3
    $region8: #{tpu_custom_call.1} parent=1 // loop_exit
      _
    %1377 = vsyncpa [#allocation4], 1
    %s1378 = scalar_lea.sflag [#allocation4], 1
    %1379 = vsyncpa %s1378, 1
    %1380 = vsyncpa [#allocation5], 1
    %s1381 = scalar_lea.sflag [#allocation5], 1
    %1382 = vsyncpa %s1381, 1

</llo_original>
